<compile_context>
chip_gen: v6e
topology: v6e:2x2x1
jax: 0.10.0
libtpu: 0.0.40
codegen_flags: <defaults>
</compile_context>

<pallas_src>
import functools

import jax
import jax.numpy as jnp
from jax import lax
from jax.experimental import pallas as pl
from jax.experimental.pallas import tpu as pltpu

_EPS = 1e-5


def _residual_block_kernel(x_ref, w1_ref, b1_ref, g1_ref, be1_ref,
                           w2_ref, b2_ref, g2_ref, be2_ref, sel_ref,
                           o_ref, *, N, H, W, C):
    R, L = x_ref.shape                       # R = N*H, L = W*C
    x = x_ref[...]
    sel = sel_ref[...]                       # (L, C) channel selector
    inv_cnt = 1.0 / float(N * H * W)

    # row -> image-row index (for height-boundary / batch-boundary masking)
    h_idx = lax.broadcasted_iota(jnp.int32, (R, 1), 0) % H

    def matmul(a, b):
        return lax.dot_general(a, b, (((1,), (0,)), ((), ())),
                               preferred_element_type=jnp.float32)

    def conv3x3(src, w_ref, b_row):
        # dh = 0 tap: no shift, no mask.
        acc = matmul(src, w_ref[1]) + b_row
        # dh = -1 / +1 taps: shift rows, zero invalid rows (zero padding in H;
        # the same mask also kills wrap-around across batch images).
        for dh in (-1, 1):
            shifted = jnp.roll(src, -dh, axis=0)
            valid = jnp.logical_and(h_idx + dh >= 0, h_idx + dh < H)
            acc = acc + matmul(jnp.where(valid, shifted, 0.0), w_ref[dh + 1])
        return acc

    def bn(y, g_row, be_row, relu):
        # single reduction pass: sum and sum-of-squares per lane column
        s1 = jnp.sum(y, axis=0, keepdims=True)          # (1, L)
        s2 = jnp.sum(y * y, axis=0, keepdims=True)      # (1, L)
        # fold the W groups of each channel via the selector matrix
        mean = matmul(s1, sel) * inv_cnt                # (1, C)
        ex2 = matmul(s2, sel) * inv_cnt                 # (1, C)
        var = ex2 - mean * mean                         # biased (training BN)
        scale = g_row * lax.rsqrt(var + _EPS)           # (1, C)
        shift = be_row - mean * scale                   # (1, C)
        # broadcast per-channel scale/shift back onto the (1, W*C) lane layout
        scale_row = lax.dot_general(scale, sel, (((1,), (1,)), ((), ())),
                                    preferred_element_type=jnp.float32)
        shift_row = lax.dot_general(shift, sel, (((1,), (1,)), ((), ())),
                                    preferred_element_type=jnp.float32)
        out = y * scale_row + shift_row                 # one fused VPU pass
        return jnp.maximum(out, 0.0) if relu else out

    h1 = bn(conv3x3(x, w1_ref, b1_ref[...]), g1_ref[...], be1_ref[...],
            relu=True)
    h2 = bn(conv3x3(h1, w2_ref, b2_ref[...]), g2_ref[...], be2_ref[...],
            relu=False)
    # residual add + final ReLU, straight from the already-resident input slab
    o_ref[...] = jnp.maximum(h2 + x, 0.0)


def residual_block(x_nchw, params):
    """x_nchw: (N, C, H, W) float32. Returns (N, C, H, W) float32."""
    w1, b1, g1, be1, w2, b2, g2, be2 = params
    N, C, H, W = x_nchw.shape
    R, L = N * H, W * C

    # layout glue: NCHW -> NHWC -> lane-dense (N*H, W*C) slab (no padding!)
    x_flat = jnp.transpose(x_nchw, (0, 2, 3, 1)).reshape(R, L).astype(jnp.float32)

    def band(w_oihw):
        # (Cout, Cin, 3, 3) -> stacked (3, W*C, W*C) banded matrices, one per
        # vertical tap dh = kh - 1.  Horizontal taps + W-boundary zero padding
        # are encoded by the off-diagonal band structure.
        mats = []
        for kh in range(3):
            m = jnp.zeros((L, L), jnp.float32)
            for kw in range(3):
                dw = kw - 1
                shift = jnp.eye(W, W, k=-dw, dtype=jnp.float32)   # S[w+dw, w]=1
                blk = jnp.transpose(w_oihw[:, :, kh, kw]).astype(jnp.float32)
                m = m + jnp.kron(shift, blk)
            mats.append(m)
        return jnp.stack(mats)                                    # (3, L, L)

    def bias_row(b):   # (C,) -> (1, W*C) tiled across width positions
        return jnp.tile(b.astype(jnp.float32), W).reshape(1, L)

    def ch_row(v):     # (C,) -> (1, C)
        return v.astype(jnp.float32).reshape(1, C)

    # selector: sel[w*C + c, c'] = 1 iff c == c'   (channel fold / un-fold)
    sel = jnp.tile(jnp.eye(C, dtype=jnp.float32), (W, 1))         # (L, C)

    vmem = pl.BlockSpec(memory_space=pltpu.MemorySpace.VMEM)
    kern = functools.partial(_residual_block_kernel, N=N, H=H, W=W, C=C)

    out_flat = pl.pallas_call(
        kern,
        out_shape=jax.ShapeDtypeStruct((R, L), jnp.float32),
        in_specs=[vmem] * 10,
        out_specs=vmem,
        compiler_params=pltpu.CompilerParams(
            vmem_limit_bytes=32 * 1024 * 1024),
    )(x_flat,
      band(w1), bias_row(b1), ch_row(g1), ch_row(be1),
      band(w2), bias_row(b2), ch_row(g2), ch_row(be2),
      sel)

    out_nhwc = out_flat.reshape(N, H, W, C)
    return jnp.transpose(out_nhwc, (0, 3, 1, 2))


def _reference(x, params):
    """Pure-JAX reference mirroring the PyTorch forward (training-mode BN)."""
    w1, b1, g1, be1, w2, b2, g2, be2 = params

    def conv(x, w, b):
        y = lax.conv_general_dilated(x, w, (1, 1), ((1, 1), (1, 1)),
                                     dimension_numbers=("NCHW", "OIHW", "NCHW"))
        return y + b[None, :, None, None]

    def bn(y, g, be):
        mean = jnp.mean(y, axis=(0, 2, 3), keepdims=True)
        var = jnp.mean((y - mean) ** 2, axis=(0, 2, 3), keepdims=True)
        return ((y - mean) / jnp.sqrt(var + _EPS)) * g[None, :, None, None] \
            + be[None, :, None, None]

    out = jax.nn.relu(bn(conv(x, w1, b1), g1, be1))
    out = bn(conv(out, w2, b2), g2, be2)
    return jax.nn.relu(out + x)


if __name__ == "__main__":
    key = jax.random.PRNGKey(0)
    N, C, H, W = 2, 4, 16, 16
    ks = jax.random.split(key, 9)

    x = jax.random.normal(ks[0], (N, C, H, W), jnp.float32)

    fan_in = C * 3 * 3
    bound = 1.0 / (fan_in ** 0.5)
    w1 = jax.random.uniform(ks[1], (C, C, 3, 3), jnp.float32, -bound, bound)
    b1 = jax.random.uniform(ks[2], (C,), jnp.float32, -bound, bound)
    w2 = jax.random.uniform(ks[3], (C, C, 3, 3), jnp.float32, -bound, bound)
    b2 = jax.random.uniform(ks[4], (C,), jnp.float32, -bound, bound)
    g1 = 1.0 + 0.1 * jax.random.normal(ks[5], (C,), jnp.float32)
    be1 = 0.1 * jax.random.normal(ks[6], (C,), jnp.float32)
    g2 = 1.0 + 0.1 * jax.random.normal(ks[7], (C,), jnp.float32)
    be2 = 0.1 * jax.random.normal(ks[8], (C,), jnp.float32)
    params = (w1, b1, g1, be1, w2, b2, g2, be2)

    out = jax.block_until_ready(residual_block(x, params))
    ref = _reference(x, params)

    assert out.shape == x.shape
    err = float(jnp.max(jnp.abs(out - ref)))
    assert jnp.allclose(out, ref, atol=2e-3, rtol=2e-3), err
    print("KERNEL_OK")
</pallas_src>

<mosaic_0001>
module attributes {stable_mosaic.version = 11 : i64} {
  func.func @_residual_block_kernel(%arg0: memref<32x64xf32, #tpu.memory_space<vmem>>, %arg1: memref<3x64x64xf32, #tpu.memory_space<vmem>>, %arg2: memref<1x64xf32, #tpu.memory_space<vmem>>, %arg3: memref<1x4xf32, #tpu.memory_space<vmem>>, %arg4: memref<1x4xf32, #tpu.memory_space<vmem>>, %arg5: memref<3x64x64xf32, #tpu.memory_space<vmem>>, %arg6: memref<1x64xf32, #tpu.memory_space<vmem>>, %arg7: memref<1x4xf32, #tpu.memory_space<vmem>>, %arg8: memref<1x4xf32, #tpu.memory_space<vmem>>, %arg9: memref<64x4xf32, #tpu.memory_space<vmem>>, %arg10: memref<32x64xf32, #tpu.memory_space<vmem>>) attributes {dimension_semantics = [], scalar_prefetch = 0 : i64, scratch_operands = 0 : i64, tpu.core_type = #tpu.core_type<tc>} {
    %c0 = arith.constant 0 : index
    %c0_0 = arith.constant 0 : index
    %0 = vector.load %arg0[%c0, %c0_0] : memref<32x64xf32, #tpu.memory_space<vmem>>, vector<32x64xf32>
    %c0_1 = arith.constant 0 : index
    %c0_2 = arith.constant 0 : index
    %1 = vector.load %arg9[%c0_1, %c0_2] : memref<64x4xf32, #tpu.memory_space<vmem>>, vector<64x4xf32>
    %2 = tpu.iota {dimensions = array<i32: 0>} : vector<32x1xi32>
    %c16_i32 = arith.constant 16 : i32
    %c0_i32 = arith.constant 0 : i32
    %3 = arith.cmpi eq, %c16_i32, %c0_i32 : i32
    %c1_i32 = arith.constant 1 : i32
    %4 = arith.select %3, %c1_i32, %c16_i32 : i32
    %5 = vector.broadcast %4 : i32 to vector<32x1xi32>
    %6 = arith.remsi %2, %5 : vector<32x1xi32>
    %c0_i32_3 = arith.constant 0 : i32
    %7 = vector.broadcast %c0_i32_3 : i32 to vector<32x1xi32>
    %8 = arith.cmpi ne, %6, %7 : vector<32x1xi32>
    %c0_i32_4 = arith.constant 0 : i32
    %9 = vector.broadcast %c0_i32_4 : i32 to vector<32x1xi32>
    %10 = arith.cmpi slt, %6, %9 : vector<32x1xi32>
    %c0_i32_5 = arith.constant 0 : i32
    %11 = arith.cmpi slt, %4, %c0_i32_5 : i32
    %12 = vector.broadcast %11 : i1 to vector<32x1xi1>
    %13 = vector.broadcast %12 : vector<32x1xi1> to vector<32x1xi1>
    %14 = arith.xori %10, %13 : vector<32x1xi1>
    %15 = arith.andi %14, %8 : vector<32x1xi1>
    %16 = vector.broadcast %4 : i32 to vector<32x1xi32>
    %17 = arith.addi %6, %16 : vector<32x1xi32>
    %18 = arith.select %15, %17, %6 : vector<32x1xi1>, vector<32x1xi32>
    %c0_6 = arith.constant 0 : index
    %c0_7 = arith.constant 0 : index
    %19 = vector.load %arg2[%c0_6, %c0_7] : memref<1x64xf32, #tpu.memory_space<vmem>>, vector<1x64xf32>
    %c1 = arith.constant 1 : index
    %c0_8 = arith.constant 0 : index
    %c0_9 = arith.constant 0 : index
    %20 = vector.load %arg1[%c1, %c0_8, %c0_9] : memref<3x64x64xf32, #tpu.memory_space<vmem>>, vector<1x64x64xf32>
    %21 = vector.shape_cast %20 : vector<1x64x64xf32> to vector<64x64xf32>
    %cst = arith.constant dense<0.000000e+00> : vector<32x64xf32>
    %22 = tpu.matmul %0, %21, %cst {dimension_numbers = #tpu.dot_dimension_numbers<[1], [0], [0], [1], [0, 0, 1, 1], [], []>} : vector<32x64xf32>, vector<64x64xf32>, vector<32x64xf32> -> vector<32x64xf32>
    %23 = vector.broadcast %19 : vector<1x64xf32> to vector<32x64xf32>
    %24 = arith.addf %22, %23 : vector<32x64xf32>
    %25 = vector.extract_strided_slice %0 {offsets = [31, 0], sizes = [1, 64], strides = [1, 1]} : vector<32x64xf32> to vector<1x64xf32>
    %26 = vector.extract_strided_slice %0 {offsets = [0, 0], sizes = [31, 64], strides = [1, 1]} : vector<32x64xf32> to vector<31x64xf32>
    %27 = tpu.concatenate %25, %26 in 0 : vector<1x64xf32>, vector<31x64xf32> -> vector<32x64xf32>
    %c-1_i32 = arith.constant -1 : i32
    %28 = vector.broadcast %c-1_i32 : i32 to vector<32x1xi32>
    %29 = arith.addi %18, %28 : vector<32x1xi32>
    %c0_i32_10 = arith.constant 0 : i32
    %30 = vector.broadcast %c0_i32_10 : i32 to vector<32x1xi32>
    %31 = arith.cmpi sge, %29, %30 : vector<32x1xi32>
    %c-1_i32_11 = arith.constant -1 : i32
    %32 = vector.broadcast %c-1_i32_11 : i32 to vector<32x1xi32>
    %33 = arith.addi %18, %32 : vector<32x1xi32>
    %c16_i32_12 = arith.constant 16 : i32
    %34 = vector.broadcast %c16_i32_12 : i32 to vector<32x1xi32>
    %35 = arith.cmpi slt, %33, %34 : vector<32x1xi32>
    %36 = arith.andi %31, %35 : vector<32x1xi1>
    %cst_13 = arith.constant 0.000000e+00 : f32
    %37 = vector.shape_cast %36 : vector<32x1xi1> to vector<32x1xi1>
    %38 = vector.broadcast %37 : vector<32x1xi1> to vector<32x64xi1>
    %39 = vector.broadcast %cst_13 : f32 to vector<32x64xf32>
    %40 = arith.select %38, %27, %39 : vector<32x64xi1>, vector<32x64xf32>
    %c0_14 = arith.constant 0 : index
    %c0_15 = arith.constant 0 : index
    %c0_16 = arith.constant 0 : index
    %41 = vector.load %arg1[%c0_14, %c0_15, %c0_16] : memref<3x64x64xf32, #tpu.memory_space<vmem>>, vector<1x64x64xf32>
    %42 = vector.shape_cast %41 : vector<1x64x64xf32> to vector<64x64xf32>
    %cst_17 = arith.constant dense<0.000000e+00> : vector<32x64xf32>
    %43 = tpu.matmul %40, %42, %cst_17 {dimension_numbers = #tpu.dot_dimension_numbers<[1], [0], [0], [1], [0, 0, 1, 1], [], []>} : vector<32x64xf32>, vector<64x64xf32>, vector<32x64xf32> -> vector<32x64xf32>
    %44 = arith.addf %24, %43 : vector<32x64xf32>
    %45 = vector.extract_strided_slice %0 {offsets = [1, 0], sizes = [31, 64], strides = [1, 1]} : vector<32x64xf32> to vector<31x64xf32>
    %46 = vector.extract_strided_slice %0 {offsets = [0, 0], sizes = [1, 64], strides = [1, 1]} : vector<32x64xf32> to vector<1x64xf32>
    %47 = tpu.concatenate %45, %46 in 0 : vector<31x64xf32>, vector<1x64xf32> -> vector<32x64xf32>
    %c1_i32_18 = arith.constant 1 : i32
    %48 = vector.broadcast %c1_i32_18 : i32 to vector<32x1xi32>
    %49 = arith.addi %18, %48 : vector<32x1xi32>
    %c0_i32_19 = arith.constant 0 : i32
    %50 = vector.broadcast %c0_i32_19 : i32 to vector<32x1xi32>
    %51 = arith.cmpi sge, %49, %50 : vector<32x1xi32>
    %c1_i32_20 = arith.constant 1 : i32
    %52 = vector.broadcast %c1_i32_20 : i32 to vector<32x1xi32>
    %53 = arith.addi %18, %52 : vector<32x1xi32>
    %c16_i32_21 = arith.constant 16 : i32
    %54 = vector.broadcast %c16_i32_21 : i32 to vector<32x1xi32>
    %55 = arith.cmpi slt, %53, %54 : vector<32x1xi32>
    %56 = arith.andi %51, %55 : vector<32x1xi1>
    %cst_22 = arith.constant 0.000000e+00 : f32
    %57 = vector.shape_cast %56 : vector<32x1xi1> to vector<32x1xi1>
    %58 = vector.broadcast %57 : vector<32x1xi1> to vector<32x64xi1>
    %59 = vector.broadcast %cst_22 : f32 to vector<32x64xf32>
    %60 = arith.select %58, %47, %59 : vector<32x64xi1>, vector<32x64xf32>
    %c2 = arith.constant 2 : index
    %c0_23 = arith.constant 0 : index
    %c0_24 = arith.constant 0 : index
    %61 = vector.load %arg1[%c2, %c0_23, %c0_24] : memref<3x64x64xf32, #tpu.memory_space<vmem>>, vector<1x64x64xf32>
    %62 = vector.shape_cast %61 : vector<1x64x64xf32> to vector<64x64xf32>
    %cst_25 = arith.constant dense<0.000000e+00> : vector<32x64xf32>
    %63 = tpu.matmul %60, %62, %cst_25 {dimension_numbers = #tpu.dot_dimension_numbers<[1], [0], [0], [1], [0, 0, 1, 1], [], []>} : vector<32x64xf32>, vector<64x64xf32>, vector<32x64xf32> -> vector<32x64xf32>
    %64 = arith.addf %44, %63 : vector<32x64xf32>
    %c0_26 = arith.constant 0 : index
    %c0_27 = arith.constant 0 : index
    %65 = vector.load %arg3[%c0_26, %c0_27] : memref<1x4xf32, #tpu.memory_space<vmem>>, vector<1x4xf32>
    %c0_28 = arith.constant 0 : index
    %c0_29 = arith.constant 0 : index
    %66 = vector.load %arg4[%c0_28, %c0_29] : memref<1x4xf32, #tpu.memory_space<vmem>>, vector<1x4xf32>
    %cst_30 = arith.constant dense<0.000000e+00> : vector<64xf32>
    %67 = vector.multi_reduction <add>, %64, %cst_30 [0] : vector<32x64xf32> to vector<64xf32>
    %68 = vector.shape_cast %67 : vector<64xf32> to vector<1x64xf32>
    %69 = arith.mulf %64, %64 : vector<32x64xf32>
    %cst_31 = arith.constant dense<0.000000e+00> : vector<64xf32>
    %70 = vector.multi_reduction <add>, %69, %cst_31 [0] : vector<32x64xf32> to vector<64xf32>
    %71 = vector.shape_cast %70 : vector<64xf32> to vector<1x64xf32>
    %cst_32 = arith.constant dense<0.000000e+00> : vector<1x4xf32>
    %72 = tpu.matmul %68, %1, %cst_32 {dimension_numbers = #tpu.dot_dimension_numbers<[1], [0], [0], [1], [0, 0, 1, 1], [], []>} : vector<1x64xf32>, vector<64x4xf32>, vector<1x4xf32> -> vector<1x4xf32>
    %cst_33 = arith.constant 0.001953125 : f32
    %73 = vector.broadcast %cst_33 : f32 to vector<1x4xf32>
    %74 = arith.mulf %72, %73 : vector<1x4xf32>
    %cst_34 = arith.constant dense<0.000000e+00> : vector<1x4xf32>
    %75 = tpu.matmul %71, %1, %cst_34 {dimension_numbers = #tpu.dot_dimension_numbers<[1], [0], [0], [1], [0, 0, 1, 1], [], []>} : vector<1x64xf32>, vector<64x4xf32>, vector<1x4xf32> -> vector<1x4xf32>
    %cst_35 = arith.constant 0.001953125 : f32
    %76 = vector.broadcast %cst_35 : f32 to vector<1x4xf32>
    %77 = arith.mulf %75, %76 : vector<1x4xf32>
    %78 = arith.mulf %74, %74 : vector<1x4xf32>
    %79 = arith.subf %77, %78 : vector<1x4xf32>
    %cst_36 = arith.constant 9.99999974E-6 : f32
    %80 = vector.broadcast %cst_36 : f32 to vector<1x4xf32>
    %81 = arith.addf %79, %80 : vector<1x4xf32>
    %82 = math.rsqrt %81 : vector<1x4xf32>
    %83 = arith.mulf %65, %82 : vector<1x4xf32>
    %84 = arith.mulf %74, %83 : vector<1x4xf32>
    %85 = arith.subf %66, %84 : vector<1x4xf32>
    %cst_37 = arith.constant dense<0.000000e+00> : vector<1x64xf32>
    %86 = tpu.matmul %83, %1, %cst_37 {dimension_numbers = #tpu.dot_dimension_numbers<[1], [1], [0], [0], [0, 0, 1, 0], [], []>} : vector<1x4xf32>, vector<64x4xf32>, vector<1x64xf32> -> vector<1x64xf32>
    %cst_38 = arith.constant dense<0.000000e+00> : vector<1x64xf32>
    %87 = tpu.matmul %85, %1, %cst_38 {dimension_numbers = #tpu.dot_dimension_numbers<[1], [1], [0], [0], [0, 0, 1, 0], [], []>} : vector<1x4xf32>, vector<64x4xf32>, vector<1x64xf32> -> vector<1x64xf32>
    %88 = vector.broadcast %86 : vector<1x64xf32> to vector<32x64xf32>
    %89 = arith.mulf %64, %88 : vector<32x64xf32>
    %90 = vector.broadcast %87 : vector<1x64xf32> to vector<32x64xf32>
    %91 = arith.addf %89, %90 : vector<32x64xf32>
    %cst_39 = arith.constant 0.000000e+00 : f32
    %92 = vector.broadcast %cst_39 : f32 to vector<32x64xf32>
    %93 = arith.maximumf %91, %92 : vector<32x64xf32>
    %c0_40 = arith.constant 0 : index
    %c0_41 = arith.constant 0 : index
    %94 = vector.load %arg6[%c0_40, %c0_41] : memref<1x64xf32, #tpu.memory_space<vmem>>, vector<1x64xf32>
    %c1_42 = arith.constant 1 : index
    %c0_43 = arith.constant 0 : index
    %c0_44 = arith.constant 0 : index
    %95 = vector.load %arg5[%c1_42, %c0_43, %c0_44] : memref<3x64x64xf32, #tpu.memory_space<vmem>>, vector<1x64x64xf32>
    %96 = vector.shape_cast %95 : vector<1x64x64xf32> to vector<64x64xf32>
    %cst_45 = arith.constant dense<0.000000e+00> : vector<32x64xf32>
    %97 = tpu.matmul %93, %96, %cst_45 {dimension_numbers = #tpu.dot_dimension_numbers<[1], [0], [0], [1], [0, 0, 1, 1], [], []>} : vector<32x64xf32>, vector<64x64xf32>, vector<32x64xf32> -> vector<32x64xf32>
    %98 = vector.broadcast %94 : vector<1x64xf32> to vector<32x64xf32>
    %99 = arith.addf %97, %98 : vector<32x64xf32>
    %100 = vector.extract_strided_slice %93 {offsets = [31, 0], sizes = [1, 64], strides = [1, 1]} : vector<32x64xf32> to vector<1x64xf32>
    %101 = vector.extract_strided_slice %93 {offsets = [0, 0], sizes = [31, 64], strides = [1, 1]} : vector<32x64xf32> to vector<31x64xf32>
    %102 = tpu.concatenate %100, %101 in 0 : vector<1x64xf32>, vector<31x64xf32> -> vector<32x64xf32>
    %c-1_i32_46 = arith.constant -1 : i32
    %103 = vector.broadcast %c-1_i32_46 : i32 to vector<32x1xi32>
    %104 = arith.addi %18, %103 : vector<32x1xi32>
    %c0_i32_47 = arith.constant 0 : i32
    %105 = vector.broadcast %c0_i32_47 : i32 to vector<32x1xi32>
    %106 = arith.cmpi sge, %104, %105 : vector<32x1xi32>
    %c-1_i32_48 = arith.constant -1 : i32
    %107 = vector.broadcast %c-1_i32_48 : i32 to vector<32x1xi32>
    %108 = arith.addi %18, %107 : vector<32x1xi32>
    %c16_i32_49 = arith.constant 16 : i32
    %109 = vector.broadcast %c16_i32_49 : i32 to vector<32x1xi32>
    %110 = arith.cmpi slt, %108, %109 : vector<32x1xi32>
    %111 = arith.andi %106, %110 : vector<32x1xi1>
    %cst_50 = arith.constant 0.000000e+00 : f32
    %112 = vector.shape_cast %111 : vector<32x1xi1> to vector<32x1xi1>
    %113 = vector.broadcast %112 : vector<32x1xi1> to vector<32x64xi1>
    %114 = vector.broadcast %cst_50 : f32 to vector<32x64xf32>
    %115 = arith.select %113, %102, %114 : vector<32x64xi1>, vector<32x64xf32>
    %c0_51 = arith.constant 0 : index
    %c0_52 = arith.constant 0 : index
    %c0_53 = arith.constant 0 : index
    %116 = vector.load %arg5[%c0_51, %c0_52, %c0_53] : memref<3x64x64xf32, #tpu.memory_space<vmem>>, vector<1x64x64xf32>
    %117 = vector.shape_cast %116 : vector<1x64x64xf32> to vector<64x64xf32>
    %cst_54 = arith.constant dense<0.000000e+00> : vector<32x64xf32>
    %118 = tpu.matmul %115, %117, %cst_54 {dimension_numbers = #tpu.dot_dimension_numbers<[1], [0], [0], [1], [0, 0, 1, 1], [], []>} : vector<32x64xf32>, vector<64x64xf32>, vector<32x64xf32> -> vector<32x64xf32>
    %119 = arith.addf %99, %118 : vector<32x64xf32>
    %120 = vector.extract_strided_slice %93 {offsets = [1, 0], sizes = [31, 64], strides = [1, 1]} : vector<32x64xf32> to vector<31x64xf32>
    %121 = vector.extract_strided_slice %93 {offsets = [0, 0], sizes = [1, 64], strides = [1, 1]} : vector<32x64xf32> to vector<1x64xf32>
    %122 = tpu.concatenate %120, %121 in 0 : vector<31x64xf32>, vector<1x64xf32> -> vector<32x64xf32>
    %c1_i32_55 = arith.constant 1 : i32
    %123 = vector.broadcast %c1_i32_55 : i32 to vector<32x1xi32>
    %124 = arith.addi %18, %123 : vector<32x1xi32>
    %c0_i32_56 = arith.constant 0 : i32
    %125 = vector.broadcast %c0_i32_56 : i32 to vector<32x1xi32>
    %126 = arith.cmpi sge, %124, %125 : vector<32x1xi32>
    %c1_i32_57 = arith.constant 1 : i32
    %127 = vector.broadcast %c1_i32_57 : i32 to vector<32x1xi32>
    %128 = arith.addi %18, %127 : vector<32x1xi32>
    %c16_i32_58 = arith.constant 16 : i32
    %129 = vector.broadcast %c16_i32_58 : i32 to vector<32x1xi32>
    %130 = arith.cmpi slt, %128, %129 : vector<32x1xi32>
    %131 = arith.andi %126, %130 : vector<32x1xi1>
    %cst_59 = arith.constant 0.000000e+00 : f32
    %132 = vector.shape_cast %131 : vector<32x1xi1> to vector<32x1xi1>
    %133 = vector.broadcast %132 : vector<32x1xi1> to vector<32x64xi1>
    %134 = vector.broadcast %cst_59 : f32 to vector<32x64xf32>
    %135 = arith.select %133, %122, %134 : vector<32x64xi1>, vector<32x64xf32>
    %c2_60 = arith.constant 2 : index
    %c0_61 = arith.constant 0 : index
    %c0_62 = arith.constant 0 : index
    %136 = vector.load %arg5[%c2_60, %c0_61, %c0_62] : memref<3x64x64xf32, #tpu.memory_space<vmem>>, vector<1x64x64xf32>
    %137 = vector.shape_cast %136 : vector<1x64x64xf32> to vector<64x64xf32>
    %cst_63 = arith.constant dense<0.000000e+00> : vector<32x64xf32>
    %138 = tpu.matmul %135, %137, %cst_63 {dimension_numbers = #tpu.dot_dimension_numbers<[1], [0], [0], [1], [0, 0, 1, 1], [], []>} : vector<32x64xf32>, vector<64x64xf32>, vector<32x64xf32> -> vector<32x64xf32>
    %139 = arith.addf %119, %138 : vector<32x64xf32>
    %c0_64 = arith.constant 0 : index
    %c0_65 = arith.constant 0 : index
    %140 = vector.load %arg7[%c0_64, %c0_65] : memref<1x4xf32, #tpu.memory_space<vmem>>, vector<1x4xf32>
    %c0_66 = arith.constant 0 : index
    %c0_67 = arith.constant 0 : index
    %141 = vector.load %arg8[%c0_66, %c0_67] : memref<1x4xf32, #tpu.memory_space<vmem>>, vector<1x4xf32>
    %cst_68 = arith.constant dense<0.000000e+00> : vector<64xf32>
    %142 = vector.multi_reduction <add>, %139, %cst_68 [0] : vector<32x64xf32> to vector<64xf32>
    %143 = vector.shape_cast %142 : vector<64xf32> to vector<1x64xf32>
    %144 = arith.mulf %139, %139 : vector<32x64xf32>
    %cst_69 = arith.constant dense<0.000000e+00> : vector<64xf32>
    %145 = vector.multi_reduction <add>, %144, %cst_69 [0] : vector<32x64xf32> to vector<64xf32>
    %146 = vector.shape_cast %145 : vector<64xf32> to vector<1x64xf32>
    %cst_70 = arith.constant dense<0.000000e+00> : vector<1x4xf32>
    %147 = tpu.matmul %143, %1, %cst_70 {dimension_numbers = #tpu.dot_dimension_numbers<[1], [0], [0], [1], [0, 0, 1, 1], [], []>} : vector<1x64xf32>, vector<64x4xf32>, vector<1x4xf32> -> vector<1x4xf32>
    %cst_71 = arith.constant 0.001953125 : f32
    %148 = vector.broadcast %cst_71 : f32 to vector<1x4xf32>
    %149 = arith.mulf %147, %148 : vector<1x4xf32>
    %cst_72 = arith.constant dense<0.000000e+00> : vector<1x4xf32>
    %150 = tpu.matmul %146, %1, %cst_72 {dimension_numbers = #tpu.dot_dimension_numbers<[1], [0], [0], [1], [0, 0, 1, 1], [], []>} : vector<1x64xf32>, vector<64x4xf32>, vector<1x4xf32> -> vector<1x4xf32>
    %cst_73 = arith.constant 0.001953125 : f32
    %151 = vector.broadcast %cst_73 : f32 to vector<1x4xf32>
    %152 = arith.mulf %150, %151 : vector<1x4xf32>
    %153 = arith.mulf %149, %149 : vector<1x4xf32>
    %154 = arith.subf %152, %153 : vector<1x4xf32>
    %cst_74 = arith.constant 9.99999974E-6 : f32
    %155 = vector.broadcast %cst_74 : f32 to vector<1x4xf32>
    %156 = arith.addf %154, %155 : vector<1x4xf32>
    %157 = math.rsqrt %156 : vector<1x4xf32>
    %158 = arith.mulf %140, %157 : vector<1x4xf32>
    %159 = arith.mulf %149, %158 : vector<1x4xf32>
    %160 = arith.subf %141, %159 : vector<1x4xf32>
    %cst_75 = arith.constant dense<0.000000e+00> : vector<1x64xf32>
    %161 = tpu.matmul %158, %1, %cst_75 {dimension_numbers = #tpu.dot_dimension_numbers<[1], [1], [0], [0], [0, 0, 1, 0], [], []>} : vector<1x4xf32>, vector<64x4xf32>, vector<1x64xf32> -> vector<1x64xf32>
    %cst_76 = arith.constant dense<0.000000e+00> : vector<1x64xf32>
    %162 = tpu.matmul %160, %1, %cst_76 {dimension_numbers = #tpu.dot_dimension_numbers<[1], [1], [0], [0], [0, 0, 1, 0], [], []>} : vector<1x4xf32>, vector<64x4xf32>, vector<1x64xf32> -> vector<1x64xf32>
    %163 = vector.broadcast %161 : vector<1x64xf32> to vector<32x64xf32>
    %164 = arith.mulf %139, %163 : vector<32x64xf32>
    %165 = vector.broadcast %162 : vector<1x64xf32> to vector<32x64xf32>
    %166 = arith.addf %164, %165 : vector<32x64xf32>
    %167 = arith.addf %166, %0 : vector<32x64xf32>
    %cst_77 = arith.constant 0.000000e+00 : f32
    %168 = vector.broadcast %cst_77 : f32 to vector<32x64xf32>
    %169 = arith.maximumf %167, %168 : vector<32x64xf32>
    %c0_78 = arith.constant 0 : index
    %c0_79 = arith.constant 0 : index
    %170 = vector.load %arg10[%c0_78, %c0_79] : memref<32x64xf32, #tpu.memory_space<vmem>>, vector<32x64xf32>
    tpu.vector_store %arg10[%c0_78, %c0_79], %169 {strides = array<i32>} : memref<32x64xf32, #tpu.memory_space<vmem>>, vector<32x64xf32>,
    return
  }
}

</mosaic_0001>

<llo_original>
// kernel: tpu_custom_call.1
$region0: #{tpu_custom_call.1}
  #allocation0 [shape = 'u32[]', space=smem, size = 0x4, offset = 0x4, fixed_abs, tag = 'smem constant byte address 0x4 - core index']
  #allocation1 [shape = 'u32[144,128]{1,0:T(1,128)}', space=vmem, size = 0x12000, scoped, tag = 'internal scratch']
  %s0 = inlined_call_operand.vmem [shape: f32[32,64], index: 0, kind: input, shape index: {}]
  %s1 = inlined_call_operand.hbm [shape: f32[3,64,64], index: 1, kind: input, shape index: {}]
  %s2 = inlined_call_operand.vmem [shape: f32[1,64], index: 2, kind: input, shape index: {}]
  %s3 = inlined_call_operand.vmem [shape: f32[1,4], index: 3, kind: input, shape index: {}]
  %s4 = inlined_call_operand.vmem [shape: f32[1,4], index: 4, kind: input, shape index: {}]
  %s5 = inlined_call_operand.hbm [shape: f32[3,64,64], index: 5, kind: input, shape index: {}]
  %s6 = inlined_call_operand.vmem [shape: f32[1,64], index: 6, kind: input, shape index: {}]
  %s7 = inlined_call_operand.vmem [shape: f32[1,4], index: 7, kind: input, shape index: {}]
  %s8 = inlined_call_operand.vmem [shape: f32[1,4], index: 8, kind: input, shape index: {}]
  %s9 = inlined_call_operand.vmem [shape: f32[64,4], index: 9, kind: input, shape index: {}]
  %s10 = inlined_call_operand.hbm [shape: f32[32,64], index: 10, kind: output, shape index: {}]
  %s11 = sld [smem:[#allocation0]]
  $region58: #{tpu_custom_call.1} parent=0
    _
  %s13 = ssub.s32 1, %s11
  %s14 = scalar_select 0, %s13, %s11
  $region1: #{tpu_custom_call.1} parent=0
    #allocation2 [shape = 'u8[98304]{0}', space=vmem, size = 0x18000, scoped, tag = 'input window, operand 1, single buffered']
    #allocation3 [shape = 's32[1]{0}', space=sflag, size = 0x4, scoped, tag = 'scoped memory for tpu_custom_call.1']
    #allocation4 [shape = 's32[1]{0}', space=sflag, size = 0x4, scoped, tag = 'scoped memory for tpu_custom_call.1']
    #allocation5 [shape = 'u8[98304]{0}', space=vmem, size = 0x18000, scoped, tag = 'input window, operand 5, single buffered']
    #allocation6 [shape = 's32[1]{0}', space=sflag, size = 0x4, scoped, tag = 'scoped memory for tpu_custom_call.1']
    #allocation7 [shape = 'u8[16384]{0}', space=vmem, size = 0x4000, scoped, tag = 'output window, operand 0, single buffered']
    %15 = vsyncpa [#allocation3], 0
    %16 = vsyncpa [#allocation6], 0
    %17 = vsyncpa [#allocation4], 0
    // Predicated region
    $region2: #{tpu_custom_call.1} parent=1 // pred_check
      _
    $region3: #{tpu_custom_call.1} parent=1 // pred_check_branch
      %19 = sbr.rel (0) target = $region5
    $region4: #{tpu_custom_call.1} parent=1 // pred_region
      _
    $region5: #{tpu_custom_call.1} parent=1 // pred_fallthru
      _
    // Predicated region
    $region6: #{tpu_custom_call.1} parent=1 // pred_check
      _
    $region7: #{tpu_custom_call.1} parent=1 // pred_check_branch
      %21 = sbr.rel (0) target = $region9
    $region8: #{tpu_custom_call.1} parent=1 // pred_region
      %s23 = ssub.s32 3072, 3072
      %24 = vsyncadd [#allocation3], %s23
      %s25 = sshll.u32 [#allocation2], 4
      %s26 = int_to_ptr.vmem [resolvable:$true] %s25
      %31 = dma.hbm_to_vmem [thread:$0]  %s1, 3072, %s26, [#allocation3], 128, 128, 8
    $region9: #{tpu_custom_call.1} parent=1 // pred_fallthru
      _
    // Predicated region
    $region10: #{tpu_custom_call.1} parent=1 // pred_check
      _
    $region11: #{tpu_custom_call.1} parent=1 // pred_check_branch
      %33 = sbr.rel (0) target = $region13
    $region12: #{tpu_custom_call.1} parent=1 // pred_region
      _
    $region13: #{tpu_custom_call.1} parent=1 // pred_fallthru
      _
    // Predicated region
    $region14: #{tpu_custom_call.1} parent=1 // pred_check
      _
    $region15: #{tpu_custom_call.1} parent=1 // pred_check_branch
      %35 = sbr.rel (0) target = $region17
    $region16: #{tpu_custom_call.1} parent=1 // pred_region
      _
    $region17: #{tpu_custom_call.1} parent=1 // pred_fallthru
      _
    // Predicated region
    $region18: #{tpu_custom_call.1} parent=1 // pred_check
      _
    $region19: #{tpu_custom_call.1} parent=1 // pred_check_branch
      %37 = sbr.rel (0) target = $region21
    $region20: #{tpu_custom_call.1} parent=1 // pred_region
      _
    $region21: #{tpu_custom_call.1} parent=1 // pred_fallthru
      _
    // Predicated region
    $region22: #{tpu_custom_call.1} parent=1 // pred_check
      _
    $region23: #{tpu_custom_call.1} parent=1 // pred_check_branch
      %39 = sbr.rel (0) target = $region25
    $region24: #{tpu_custom_call.1} parent=1 // pred_region
      %s41 = ssub.s32 3072, 3072
      %42 = vsyncadd [#allocation6], %s41
      %s43 = sshll.u32 [#allocation5], 4
      %s44 = int_to_ptr.vmem [resolvable:$true] %s43
      %49 = dma.hbm_to_vmem [thread:$0]  %s5, 3072, %s44, [#allocation6], 128, 128, 8
    $region25: #{tpu_custom_call.1} parent=1 // pred_fallthru
      _
    // Predicated region
    $region26: #{tpu_custom_call.1} parent=1 // pred_check
      _
    $region27: #{tpu_custom_call.1} parent=1 // pred_check_branch
      %51 = sbr.rel (0) target = $region29
    $region28: #{tpu_custom_call.1} parent=1 // pred_region
      _
    $region29: #{tpu_custom_call.1} parent=1 // pred_fallthru
      _
    // Predicated region
    $region30: #{tpu_custom_call.1} parent=1 // pred_check
      _
    $region31: #{tpu_custom_call.1} parent=1 // pred_check_branch
      %53 = sbr.rel (0) target = $region33
    $region32: #{tpu_custom_call.1} parent=1 // pred_region
      _
    $region33: #{tpu_custom_call.1} parent=1 // pred_fallthru
      _
    // Predicated region
    $region34: #{tpu_custom_call.1} parent=1 // pred_check
      _
    $region35: #{tpu_custom_call.1} parent=1 // pred_check_branch
      %55 = sbr.rel (0) target = $region37
    $region36: #{tpu_custom_call.1} parent=1 // pred_region
      _
    $region37: #{tpu_custom_call.1} parent=1 // pred_fallthru
      _
    // Predicated region
    $region38: #{tpu_custom_call.1} parent=1 // pred_check
      _
    $region39: #{tpu_custom_call.1} parent=1 // pred_check_branch
      %57 = sbr.rel (0) target = $region41
    $region40: #{tpu_custom_call.1} parent=1 // pred_region
      _
    $region41: #{tpu_custom_call.1} parent=1 // pred_fallthru
      _
    // Predicated region
    $region42: #{tpu_custom_call.1} parent=1 // pred_check
      _
    $region43: #{tpu_custom_call.1} parent=1 // pred_check_branch
      %59 = sbr.rel (0) target = $region45
    $region44: #{tpu_custom_call.1} parent=1 // pred_region
      %60 = dma.done [#allocation3], 3072
    $region45: #{tpu_custom_call.1} parent=1 // pred_fallthru
      _
    // Predicated region
    $region46: #{tpu_custom_call.1} parent=1 // pred_check
      _
    $region47: #{tpu_custom_call.1} parent=1 // pred_check_branch
      %62 = sbr.rel (0) target = $region49
    $region48: #{tpu_custom_call.1} parent=1 // pred_region
      %63 = dma.done [#allocation6], 3072
    $region49: #{tpu_custom_call.1} parent=1 // pred_fallthru
      _
    %v64 = vld [vmem:[%s0] sm:$0xff]
    %v65 = vld [vmem:[%s0 + $0x8] sm:$0xff]
    %v66 = vld [vmem:[%s0 + $0x10] sm:$0xff]
    %v67 = vld [vmem:[%s0 + $0x18] sm:$0xff]
    %v68 = vld [vmem:[%s9] sm:$0xff]
    %v69 = vld [vmem:[%s9 + $0x8] sm:$0xff]
    %v70 = vld [vmem:[%s9 + $0x10] sm:$0xff]
    %v71 = vld [vmem:[%s9 + $0x18] sm:$0xff]
    %v72 = vld [vmem:[%s9 + $0x20] sm:$0xff]
    %v73 = vld [vmem:[%s9 + $0x28] sm:$0xff]
    %v74 = vld [vmem:[%s9 + $0x30] sm:$0xff]
    %v75 = vld [vmem:[%s9 + $0x38] sm:$0xff]
    %v76 = vlaneseq
    %v77 = vshrl.u32 %v76, 7
    %v78 = vadd.s32 %v77, 8
    %v79 = vadd.s32 %v77, 16
    %v80 = vadd.s32 %v77, 24
    %vm81 = vcmp.lt.s32.totalorder %v77, 0
    %v82 = vsub.s32 0, %v77
    %v83 = vsel %vm81, %v82, %v77
    %v84 = vshrl.u32 %v83, 4
    %v85 = vand.u32 %v83, 15
    %v86 = vsub.s32 0, %v85
    %v87 = vsel %vm81, %v86, %v85
    %vm88 = vcmp.lt.s32.totalorder %v78, 0
    %v89 = vsub.s32 0, %v78
    %v90 = vsel %vm88, %v89, %v78
    %v91 = vshrl.u32 %v90, 4
    %v92 = vand.u32 %v90, 15
    %v93 = vsub.s32 0, %v92
    %v94 = vsel %vm88, %v93, %v92
    %vm95 = vcmp.lt.s32.totalorder %v79, 0
    %v96 = vsub.s32 0, %v79
    %v97 = vsel %vm95, %v96, %v79
    %v98 = vshrl.u32 %v97, 4
    %v99 = vand.u32 %v97, 15
    %v100 = vsub.s32 0, %v99
    %v101 = vsel %vm95, %v100, %v99
    %vm102 = vcmp.lt.s32.totalorder %v80, 0
    %v103 = vsub.s32 0, %v80
    %v104 = vsel %vm102, %v103, %v80
    %v105 = vshrl.u32 %v104, 4
    %v106 = vand.u32 %v104, 15
    %v107 = vsub.s32 0, %v106
    %v108 = vsel %vm102, %v107, %v106
    %vm109 = vcmp.ne.s32.totalorder %v87, 0
    %vm110 = vcmp.ne.s32.totalorder %v94, 0
    %vm111 = vcmp.ne.s32.totalorder %v101, 0
    %vm112 = vcmp.ne.s32.totalorder %v108, 0
    %vm113 = vcmp.lt.s32.totalorder %v87, 0
    %vm114 = vcmp.lt.s32.totalorder %v94, 0
    %vm115 = vcmp.lt.s32.totalorder %v101, 0
    %vm116 = vcmp.lt.s32.totalorder %v108, 0
    %vm117 = vmand %vm113, %vm109
    %vm118 = vmand %vm114, %vm110
    %vm119 = vmand %vm115, %vm111
    %vm120 = vmand %vm116, %vm112
    %v121 = vadd.s32 %v87, 16
    %v122 = vadd.s32 %v94, 16
    %v123 = vadd.s32 %v101, 16
    %v124 = vadd.s32 %v108, 16
    %v125 = vsel %vm117, %v121, %v87
    %v126 = vsel %vm118, %v122, %v94
    %v127 = vsel %vm119, %v123, %v101
    %v128 = vsel %vm120, %v124, %v108
    %v129 = vld [vmem:[%s2] sm:$0x1]
    %s130 = scalar_lea.vmem [#allocation2], 64
    %v131 = vld [vmem:[%s130] sm:$0xff]
    %v132 = vld [vmem:[%s130 + $0x8] sm:$0xff]
    %v133 = vld [vmem:[%s130 + $0x10] sm:$0xff]
    %v134 = vld [vmem:[%s130 + $0x18] sm:$0xff]
    %v135 = vld [vmem:[%s130 + $0x20] sm:$0xff]
    %v136 = vld [vmem:[%s130 + $0x28] sm:$0xff]
    %v137 = vld [vmem:[%s130 + $0x30] sm:$0xff]
    %v138 = vld [vmem:[%s130 + $0x38] sm:$0xff]
    %v140 = vlaneseq
    %v141 = vshrl.u32 %v140, 7
    %v142 = vsub.s32 0, %v141
    %v143 = vrot.slane %v129, %v142
    %vm145 = vcmask 523264
    %v147 = vsel %vm145, %v64, 0
    %v150 = vsel %vm145, %v65, 0
    %v153 = vsel %vm145, %v66, 0
    %v156 = vsel %vm145, %v67, 0
    %158 = vmatprep.subr.mxu0 0.0
    %159 = vmatpush1.msra.mxu0 0.0
    %160 = vmatprep.subr.mxu0 0.0
    %161 = vmatpush1.msra.mxu0 0.0
    %162 = vmatprep.subr.mxu0 0.0
    %163 = vmatpush1.msra.mxu0 0.0
    %164 = vmatprep.subr.mxu0 0.0
    %165 = vmatpush1.msra.mxu0 0.0
    %166 = vmatprep.subr.mxu0 0.0
    %167 = vmatpush1.msra.mxu0 0.0
    %168 = vmatprep.subr.mxu0 0.0
    %169 = vmatpush1.msra.mxu0 0.0
    %170 = vmatprep.subr.mxu0 0.0
    %171 = vmatpush1.msra.mxu0 0.0
    %172 = vmatprep.subr.mxu0 0.0
    %173 = vmatpush1.msra.mxu0 0.0
    %174 = vmatprep.subr.mxu0 0.0
    %175 = vmatpush1.msra.mxu0 %v138
    %176 = vmatprep.subr.mxu0 0.0
    %177 = vmatpush1.msra.mxu0 %v137
    %178 = vmatprep.subr.mxu0 0.0
    %179 = vmatpush1.msra.mxu0 %v136
    %180 = vmatprep.subr.mxu0 0.0
    %181 = vmatpush1.msra.mxu0 %v135
    %182 = vmatprep.subr.mxu0 0.0
    %183 = vmatpush1.msra.mxu0 %v134
    %184 = vmatprep.subr.mxu0 0.0
    %185 = vmatpush1.msra.mxu0 %v133
    %186 = vmatprep.subr.mxu0 0.0
    %187 = vmatpush1.msra.mxu0 %v132
    %188 = vmatprep.subr.mxu0 0.0
    %189 = vmatpush1.msra.mxu0 %v131
    %190 = vmatprep.subr.mxu0 0.0
    %191 = vmatpush2.msra.mxu0 0.0
    %192 = vmatprep.subr.mxu0 0.0
    %193 = vmatpush2.msra.mxu0 0.0
    %194 = vmatprep.subr.mxu0 0.0
    %195 = vmatpush2.msra.mxu0 0.0
    %196 = vmatprep.subr.mxu0 0.0
    %197 = vmatpush2.msra.mxu0 0.0
    %198 = vmatprep.subr.mxu0 0.0
    %199 = vmatpush2.msra.mxu0 0.0
    %200 = vmatprep.subr.mxu0 0.0
    %201 = vmatpush2.msra.mxu0 0.0
    %202 = vmatprep.subr.mxu0 0.0
    %203 = vmatpush2.msra.mxu0 0.0
    %204 = vmatprep.subr.mxu0 0.0
    %205 = vmatpush2.msra.mxu0 0.0
    %206 = vmatprep.subr.mxu0 0.0
    %207 = vmatpush2.msra.mxu0 0.0
    %208 = vmatprep.subr.mxu0 0.0
    %209 = vmatpush2.msra.mxu0 0.0
    %210 = vmatprep.subr.mxu0 0.0
    %211 = vmatpush2.msra.mxu0 0.0
    %212 = vmatprep.subr.mxu0 0.0
    %213 = vmatpush2.msra.mxu0 0.0
    %214 = vmatprep.subr.mxu0 0.0
    %215 = vmatpush2.msra.mxu0 0.0
    %216 = vmatprep.subr.mxu0 0.0
    %217 = vmatpush2.msra.mxu0 0.0
    %218 = vmatprep.subr.mxu0 0.0
    %219 = vmatpush2.msra.mxu0 0.0
    %220 = vmatprep.subr.mxu0 0.0
    %221 = vmatpush2.msra.mxu0 0.0
    %222 = vmatprep.mubr.f32.mxu0 0.0
    %223 = vmatmul.mubr.f32.gmra.mxu0 %v147
    %v224 = vpop.f32.mrf.mxu0
    %v225 = vadd.f32 %v143, %v224
    %v226 = vpop.f32.mrf.mxu0
    %227 = vmatprep.mubr.f32.mxu0 0.0
    %228 = vmatmul.mubr.f32.gmra.mxu0 %v150
    %v229 = vpop.f32.mrf.mxu0
    %v230 = vadd.f32 %v143, %v229
    %v231 = vpop.f32.mrf.mxu0
    %232 = vmatprep.mubr.f32.mxu0 0.0
    %233 = vmatmul.mubr.f32.gmra.mxu0 %v153
    %v234 = vpop.f32.mrf.mxu0
    %v235 = vadd.f32 %v143, %v234
    %v236 = vpop.f32.mrf.mxu0
    %237 = vmatprep.mubr.f32.mxu0 0.0
    %238 = vmatmul.mubr.f32.gmra.mxu0 %v156
    %v239 = vpop.f32.mrf.mxu0
    %v240 = vadd.f32 %v143, %v239
    %v241 = vpop.f32.mrf.mxu0
    %242 = vdwg.mxu0
    %v243 = vrot.slane %v67, 7
    %vm245 = vcmask 1040384
    %v246 = vrot.slane %v64, 7
    %v247 = vrot.slane %v65, 7
    %v248 = vsel %vm245, %v246, %v247
    %v249 = vrot.slane %v66, 7
    %v250 = vsel %vm245, %v247, %v249
    %v251 = vsel %vm245, %v249, %v243
    %v256 = vsel %vm245, %v243, %v246
    %v257 = vadd.s32 %v125, 4294967295
    %v258 = vadd.s32 %v126, 4294967295
    %v259 = vadd.s32 %v127, 4294967295
    %v260 = vadd.s32 %v128, 4294967295
    %vm261 = vcmp.ge.s32.totalorder %v257, 0
    %vm262 = vcmp.ge.s32.totalorder %v258, 0
    %vm263 = vcmp.ge.s32.totalorder %v259, 0
    %vm264 = vcmp.ge.s32.totalorder %v260, 0
    %vm265 = vcmp.lt.s32.totalorder %v257, 16
    %vm266 = vcmp.lt.s32.totalorder %v258, 16
    %vm267 = vcmp.lt.s32.totalorder %v259, 16
    %vm268 = vcmp.lt.s32.totalorder %v260, 16
    %vm269 = vmand %vm261, %vm265
    %vm270 = vmand %vm262, %vm266
    %vm271 = vmand %vm263, %vm267
    %vm272 = vmand %vm264, %vm268
    %v273 = vsel %vm269, 1, 0
    %v274 = vsel %vm270, 1, 0
    %v275 = vsel %vm271, 1, 0
    %v276 = vsel %vm272, 1, 0
    %vm277 = vcmp.eq.s32.totalorder %v273, 1
    %vm278 = vcmp.eq.s32.totalorder %v274, 1
    %vm279 = vcmp.eq.s32.totalorder %v275, 1
    %vm280 = vcmp.eq.s32.totalorder %v276, 1
    %v281 = vsel %vm277, %v256, 0.0
    %v282 = vsel %vm278, %v248, 0.0
    %v283 = vsel %vm279, %v250, 0.0
    %v284 = vsel %vm280, %v251, 0.0
    %v285 = vld [vmem:[#allocation2] sm:$0xff]
    %v286 = vld [vmem:[#allocation2 + $0x8] sm:$0xff]
    %v287 = vld [vmem:[#allocation2 + $0x10] sm:$0xff]
    %v288 = vld [vmem:[#allocation2 + $0x18] sm:$0xff]
    %v289 = vld [vmem:[#allocation2 + $0x20] sm:$0xff]
    %v290 = vld [vmem:[#allocation2 + $0x28] sm:$0xff]
    %v291 = vld [vmem:[#allocation2 + $0x30] sm:$0xff]
    %v292 = vld [vmem:[#allocation2 + $0x38] sm:$0xff]
    %v294 = vsel %vm145, %v281, 0
    %v297 = vsel %vm145, %v282, 0
    %v300 = vsel %vm145, %v283, 0
    %v303 = vsel %vm145, %v284, 0
    %305 = vmatprep.subr.mxu0 0.0
    %306 = vmatpush1.msra.mxu0 0.0
    %307 = vmatprep.subr.mxu0 0.0
    %308 = vmatpush1.msra.mxu0 0.0
    %309 = vmatprep.subr.mxu0 0.0
    %310 = vmatpush1.msra.mxu0 0.0
    %311 = vmatprep.subr.mxu0 0.0
    %312 = vmatpush1.msra.mxu0 0.0
    %313 = vmatprep.subr.mxu0 0.0
    %314 = vmatpush1.msra.mxu0 0.0
    %315 = vmatprep.subr.mxu0 0.0
    %316 = vmatpush1.msra.mxu0 0.0
    %317 = vmatprep.subr.mxu0 0.0
    %318 = vmatpush1.msra.mxu0 0.0
    %319 = vmatprep.subr.mxu0 0.0
    %320 = vmatpush1.msra.mxu0 0.0
    %321 = vmatprep.subr.mxu0 0.0
    %322 = vmatpush1.msra.mxu0 %v292
    %323 = vmatprep.subr.mxu0 0.0
    %324 = vmatpush1.msra.mxu0 %v291
    %325 = vmatprep.subr.mxu0 0.0
    %326 = vmatpush1.msra.mxu0 %v290
    %327 = vmatprep.subr.mxu0 0.0
    %328 = vmatpush1.msra.mxu0 %v289
    %329 = vmatprep.subr.mxu0 0.0
    %330 = vmatpush1.msra.mxu0 %v288
    %331 = vmatprep.subr.mxu0 0.0
    %332 = vmatpush1.msra.mxu0 %v287
    %333 = vmatprep.subr.mxu0 0.0
    %334 = vmatpush1.msra.mxu0 %v286
    %335 = vmatprep.subr.mxu0 0.0
    %336 = vmatpush1.msra.mxu0 %v285
    %337 = vmatprep.subr.mxu0 0.0
    %338 = vmatpush2.msra.mxu0 0.0
    %339 = vmatprep.subr.mxu0 0.0
    %340 = vmatpush2.msra.mxu0 0.0
    %341 = vmatprep.subr.mxu0 0.0
    %342 = vmatpush2.msra.mxu0 0.0
    %343 = vmatprep.subr.mxu0 0.0
    %344 = vmatpush2.msra.mxu0 0.0
    %345 = vmatprep.subr.mxu0 0.0
    %346 = vmatpush2.msra.mxu0 0.0
    %347 = vmatprep.subr.mxu0 0.0
    %348 = vmatpush2.msra.mxu0 0.0
    %349 = vmatprep.subr.mxu0 0.0
    %350 = vmatpush2.msra.mxu0 0.0
    %351 = vmatprep.subr.mxu0 0.0
    %352 = vmatpush2.msra.mxu0 0.0
    %353 = vmatprep.subr.mxu0 0.0
    %354 = vmatpush2.msra.mxu0 0.0
    %355 = vmatprep.subr.mxu0 0.0
    %356 = vmatpush2.msra.mxu0 0.0
    %357 = vmatprep.subr.mxu0 0.0
    %358 = vmatpush2.msra.mxu0 0.0
    %359 = vmatprep.subr.mxu0 0.0
    %360 = vmatpush2.msra.mxu0 0.0
    %361 = vmatprep.subr.mxu0 0.0
    %362 = vmatpush2.msra.mxu0 0.0
    %363 = vmatprep.subr.mxu0 0.0
    %364 = vmatpush2.msra.mxu0 0.0
    %365 = vmatprep.subr.mxu0 0.0
    %366 = vmatpush2.msra.mxu0 0.0
    %367 = vmatprep.subr.mxu0 0.0
    %368 = vmatpush2.msra.mxu0 0.0
    %369 = vmatprep.mubr.f32.mxu0 0.0
    %370 = vmatmul.mubr.f32.gmra.mxu0 %v294
    %v371 = vpop.f32.mrf.mxu0
    %v372 = vadd.f32 0.0, %v371
    %v373 = vpop.f32.mrf.mxu0
    %374 = vmatprep.mubr.f32.mxu0 0.0
    %375 = vmatmul.mubr.f32.gmra.mxu0 %v297
    %v376 = vpop.f32.mrf.mxu0
    %v377 = vadd.f32 0.0, %v376
    %v378 = vpop.f32.mrf.mxu0
    %379 = vmatprep.mubr.f32.mxu0 0.0
    %380 = vmatmul.mubr.f32.gmra.mxu0 %v300
    %v381 = vpop.f32.mrf.mxu0
    %v382 = vadd.f32 0.0, %v381
    %v383 = vpop.f32.mrf.mxu0
    %384 = vmatprep.mubr.f32.mxu0 0.0
    %385 = vmatmul.mubr.f32.gmra.mxu0 %v303
    %v386 = vpop.f32.mrf.mxu0
    %v387 = vadd.f32 0.0, %v386
    %v388 = vpop.f32.mrf.mxu0
    %389 = vdwg.mxu0
    %v390 = vadd.f32 %v225, %v372
    %v391 = vadd.f32 %v230, %v377
    %v392 = vadd.f32 %v235, %v382
    %v393 = vadd.f32 %v240, %v387
    %vm394 = vcmask 1046528
    %v395 = vrot.slane %v64, 1
    %v396 = vrot.slane %v65, 1
    %v397 = vsel %vm394, %v395, %v396
    %v398 = vrot.slane %v66, 1
    %v399 = vsel %vm394, %v396, %v398
    %v400 = vrot.slane %v67, 1
    %v401 = vsel %vm394, %v398, %v400
    %v407 = vsel %vm394, %v400, %v395
    %v408 = vadd.s32 %v125, 1
    %v409 = vadd.s32 %v126, 1
    %v410 = vadd.s32 %v127, 1
    %v411 = vadd.s32 %v128, 1
    %vm412 = vcmp.ge.s32.totalorder %v408, 0
    %vm413 = vcmp.ge.s32.totalorder %v409, 0
    %vm414 = vcmp.ge.s32.totalorder %v410, 0
    %vm415 = vcmp.ge.s32.totalorder %v411, 0
    %vm416 = vcmp.lt.s32.totalorder %v408, 16
    %vm417 = vcmp.lt.s32.totalorder %v409, 16
    %vm418 = vcmp.lt.s32.totalorder %v410, 16
    %vm419 = vcmp.lt.s32.totalorder %v411, 16
    %vm420 = vmand %vm412, %vm416
    %vm421 = vmand %vm413, %vm417
    %vm422 = vmand %vm414, %vm418
    %vm423 = vmand %vm415, %vm419
    %v424 = vsel %vm420, 1, 0
    %v425 = vsel %vm421, 1, 0
    %v426 = vsel %vm422, 1, 0
    %v427 = vsel %vm423, 1, 0
    %vm428 = vcmp.eq.s32.totalorder %v424, 1
    %vm429 = vcmp.eq.s32.totalorder %v425, 1
    %vm430 = vcmp.eq.s32.totalorder %v426, 1
    %vm431 = vcmp.eq.s32.totalorder %v427, 1
    %v432 = vsel %vm428, %v397, 0.0
    %v433 = vsel %vm429, %v399, 0.0
    %v434 = vsel %vm430, %v401, 0.0
    %v435 = vsel %vm431, %v407, 0.0
    %s436 = scalar_lea.vmem [#allocation2], 128
    %v437 = vld [vmem:[%s436] sm:$0xff]
    %v438 = vld [vmem:[%s436 + $0x8] sm:$0xff]
    %v439 = vld [vmem:[%s436 + $0x10] sm:$0xff]
    %v440 = vld [vmem:[%s436 + $0x18] sm:$0xff]
    %v441 = vld [vmem:[%s436 + $0x20] sm:$0xff]
    %v442 = vld [vmem:[%s436 + $0x28] sm:$0xff]
    %v443 = vld [vmem:[%s436 + $0x30] sm:$0xff]
    %v444 = vld [vmem:[%s436 + $0x38] sm:$0xff]
    %v446 = vsel %vm145, %v432, 0
    %v449 = vsel %vm145, %v433, 0
    %v452 = vsel %vm145, %v434, 0
    %v455 = vsel %vm145, %v435, 0
    %457 = vmatprep.subr.mxu0 0.0
    %458 = vmatpush1.msra.mxu0 0.0
    %459 = vmatprep.subr.mxu0 0.0
    %460 = vmatpush1.msra.mxu0 0.0
    %461 = vmatprep.subr.mxu0 0.0
    %462 = vmatpush1.msra.mxu0 0.0
    %463 = vmatprep.subr.mxu0 0.0
    %464 = vmatpush1.msra.mxu0 0.0
    %465 = vmatprep.subr.mxu0 0.0
    %466 = vmatpush1.msra.mxu0 0.0
    %467 = vmatprep.subr.mxu0 0.0
    %468 = vmatpush1.msra.mxu0 0.0
    %469 = vmatprep.subr.mxu0 0.0
    %470 = vmatpush1.msra.mxu0 0.0
    %471 = vmatprep.subr.mxu0 0.0
    %472 = vmatpush1.msra.mxu0 0.0
    %473 = vmatprep.subr.mxu0 0.0
    %474 = vmatpush1.msra.mxu0 %v444
    %475 = vmatprep.subr.mxu0 0.0
    %476 = vmatpush1.msra.mxu0 %v443
    %477 = vmatprep.subr.mxu0 0.0
    %478 = vmatpush1.msra.mxu0 %v442
    %479 = vmatprep.subr.mxu0 0.0
    %480 = vmatpush1.msra.mxu0 %v441
    %481 = vmatprep.subr.mxu0 0.0
    %482 = vmatpush1.msra.mxu0 %v440
    %483 = vmatprep.subr.mxu0 0.0
    %484 = vmatpush1.msra.mxu0 %v439
    %485 = vmatprep.subr.mxu0 0.0
    %486 = vmatpush1.msra.mxu0 %v438
    %487 = vmatprep.subr.mxu0 0.0
    %488 = vmatpush1.msra.mxu0 %v437
    %489 = vmatprep.subr.mxu0 0.0
    %490 = vmatpush2.msra.mxu0 0.0
    %491 = vmatprep.subr.mxu0 0.0
    %492 = vmatpush2.msra.mxu0 0.0
    %493 = vmatprep.subr.mxu0 0.0
    %494 = vmatpush2.msra.mxu0 0.0
    %495 = vmatprep.subr.mxu0 0.0
    %496 = vmatpush2.msra.mxu0 0.0
    %497 = vmatprep.subr.mxu0 0.0
    %498 = vmatpush2.msra.mxu0 0.0
    %499 = vmatprep.subr.mxu0 0.0
    %500 = vmatpush2.msra.mxu0 0.0
    %501 = vmatprep.subr.mxu0 0.0
    %502 = vmatpush2.msra.mxu0 0.0
    %503 = vmatprep.subr.mxu0 0.0
    %504 = vmatpush2.msra.mxu0 0.0
    %505 = vmatprep.subr.mxu0 0.0
    %506 = vmatpush2.msra.mxu0 0.0
    %507 = vmatprep.subr.mxu0 0.0
    %508 = vmatpush2.msra.mxu0 0.0
    %509 = vmatprep.subr.mxu0 0.0
    %510 = vmatpush2.msra.mxu0 0.0
    %511 = vmatprep.subr.mxu0 0.0
    %512 = vmatpush2.msra.mxu0 0.0
    %513 = vmatprep.subr.mxu0 0.0
    %514 = vmatpush2.msra.mxu0 0.0
    %515 = vmatprep.subr.mxu0 0.0
    %516 = vmatpush2.msra.mxu0 0.0
    %517 = vmatprep.subr.mxu0 0.0
    %518 = vmatpush2.msra.mxu0 0.0
    %519 = vmatprep.subr.mxu0 0.0
    %520 = vmatpush2.msra.mxu0 0.0
    %521 = vmatprep.mubr.f32.mxu0 0.0
    %522 = vmatmul.mubr.f32.gmra.mxu0 %v446
    %v523 = vpop.f32.mrf.mxu0
    %v524 = vadd.f32 0.0, %v523
    %v525 = vpop.f32.mrf.mxu0
    %526 = vmatprep.mubr.f32.mxu0 0.0
    %527 = vmatmul.mubr.f32.gmra.mxu0 %v449
    %v528 = vpop.f32.mrf.mxu0
    %v529 = vadd.f32 0.0, %v528
    %v530 = vpop.f32.mrf.mxu0
    %531 = vmatprep.mubr.f32.mxu0 0.0
    %532 = vmatmul.mubr.f32.gmra.mxu0 %v452
    %v533 = vpop.f32.mrf.mxu0
    %v534 = vadd.f32 0.0, %v533
    %v535 = vpop.f32.mrf.mxu0
    %536 = vmatprep.mubr.f32.mxu0 0.0
    %537 = vmatmul.mubr.f32.gmra.mxu0 %v455
    %v538 = vpop.f32.mrf.mxu0
    %v539 = vadd.f32 0.0, %v538
    %v540 = vpop.f32.mrf.mxu0
    %541 = vdwg.mxu0
    %v542 = vadd.f32 %v390, %v524
    %v543 = vadd.f32 %v391, %v529
    %v544 = vadd.f32 %v392, %v534
    %v545 = vadd.f32 %v393, %v539
    %v546 = vld [vmem:[%s3] sm:$0x1]
    %v547 = vld [vmem:[%s4] sm:$0x1]
    %v548 = vsel %vm145, %v542, 0.0
    %v549 = vsel %vm145, %v543, 0.0
    %v550 = vadd.f32 %v548, %v549
    %v551 = vsel %vm145, %v544, 0.0
    %v552 = vadd.f32 %v550, %v551
    %v553 = vsel %vm145, %v545, 0.0
    %v554 = vadd.f32 %v552, %v553
    %v555 = vrot.slane %v554, 4
    %v556 = vadd.f32 %v554, %v555
    %v557 = vrot.slane %v556, 2
    %v558 = vadd.f32 %v556, %v557
    %v559 = vrot.slane %v558, 1
    %v560 = vadd.f32 %v558, %v559
    %v561 = vmul.f32 %v542, %v542
    %v562 = vmul.f32 %v543, %v543
    %v563 = vmul.f32 %v544, %v544
    %v564 = vmul.f32 %v545, %v545
    %v565 = vsel %vm145, %v561, 0.0
    %v566 = vsel %vm145, %v562, 0.0
    %v567 = vadd.f32 %v565, %v566
    %v568 = vsel %vm145, %v563, 0.0
    %v569 = vadd.f32 %v567, %v568
    %v570 = vsel %vm145, %v564, 0.0
    %v571 = vadd.f32 %v569, %v570
    %v572 = vrot.slane %v571, 4
    %v573 = vadd.f32 %v571, %v572
    %v574 = vrot.slane %v573, 2
    %v575 = vadd.f32 %v573, %v574
    %v576 = vrot.slane %v575, 1
    %v577 = vadd.f32 %v575, %v576
    %v579 = vsel %vm145, %v560, 0
    %581 = vmatprep.subr.mxu0 0.0
    %582 = vmatpush1.msra.mxu0 0.0
    %583 = vmatprep.subr.mxu0 0.0
    %584 = vmatpush1.msra.mxu0 0.0
    %585 = vmatprep.subr.mxu0 0.0
    %586 = vmatpush1.msra.mxu0 0.0
    %587 = vmatprep.subr.mxu0 0.0
    %588 = vmatpush1.msra.mxu0 0.0
    %589 = vmatprep.subr.mxu0 0.0
    %590 = vmatpush1.msra.mxu0 0.0
    %591 = vmatprep.subr.mxu0 0.0
    %592 = vmatpush1.msra.mxu0 0.0
    %593 = vmatprep.subr.mxu0 0.0
    %594 = vmatpush1.msra.mxu0 0.0
    %595 = vmatprep.subr.mxu0 0.0
    %596 = vmatpush1.msra.mxu0 0.0
    %597 = vmatprep.subr.mxu0 0.0
    %598 = vmatpush1.msra.mxu0 %v75
    %599 = vmatprep.subr.mxu0 0.0
    %600 = vmatpush1.msra.mxu0 %v74
    %601 = vmatprep.subr.mxu0 0.0
    %602 = vmatpush1.msra.mxu0 %v73
    %603 = vmatprep.subr.mxu0 0.0
    %604 = vmatpush1.msra.mxu0 %v72
    %605 = vmatprep.subr.mxu0 0.0
    %606 = vmatpush1.msra.mxu0 %v71
    %607 = vmatprep.subr.mxu0 0.0
    %608 = vmatpush1.msra.mxu0 %v70
    %609 = vmatprep.subr.mxu0 0.0
    %610 = vmatpush1.msra.mxu0 %v69
    %611 = vmatprep.subr.mxu0 0.0
    %612 = vmatpush1.msra.mxu0 %v68
    %613 = vmatprep.subr.mxu0 0.0
    %614 = vmatpush2.msra.mxu0 0.0
    %615 = vmatprep.subr.mxu0 0.0
    %616 = vmatpush2.msra.mxu0 0.0
    %617 = vmatprep.subr.mxu0 0.0
    %618 = vmatpush2.msra.mxu0 0.0
    %619 = vmatprep.subr.mxu0 0.0
    %620 = vmatpush2.msra.mxu0 0.0
    %621 = vmatprep.subr.mxu0 0.0
    %622 = vmatpush2.msra.mxu0 0.0
    %623 = vmatprep.subr.mxu0 0.0
    %624 = vmatpush2.msra.mxu0 0.0
    %625 = vmatprep.subr.mxu0 0.0
    %626 = vmatpush2.msra.mxu0 0.0
    %627 = vmatprep.subr.mxu0 0.0
    %628 = vmatpush2.msra.mxu0 0.0
    %629 = vmatprep.subr.mxu0 0.0
    %630 = vmatpush2.msra.mxu0 0.0
    %631 = vmatprep.subr.mxu0 0.0
    %632 = vmatpush2.msra.mxu0 0.0
    %633 = vmatprep.subr.mxu0 0.0
    %634 = vmatpush2.msra.mxu0 0.0
    %635 = vmatprep.subr.mxu0 0.0
    %636 = vmatpush2.msra.mxu0 0.0
    %637 = vmatprep.subr.mxu0 0.0
    %638 = vmatpush2.msra.mxu0 0.0
    %639 = vmatprep.subr.mxu0 0.0
    %640 = vmatpush2.msra.mxu0 0.0
    %641 = vmatprep.subr.mxu0 0.0
    %642 = vmatpush2.msra.mxu0 0.0
    %643 = vmatprep.subr.mxu0 0.0
    %644 = vmatpush2.msra.mxu0 0.0
    %645 = vmatprep.mubr.f32.mxu0 0.0
    %646 = vmatmul.mubr.f32.gmra.mxu0 %v579
    %v647 = vpop.f32.mrf.mxu0
    %v648 = vadd.f32 0.0, %v647
    %v649 = vpop.f32.mrf.mxu0
    %650 = vdwg.mxu0
    %v651 = vmul.f32 %v648, 0.001953125
    %v653 = vsel %vm145, %v577, 0
    %655 = vmatprep.subr.mxu0 0.0
    %656 = vmatpush1.msra.mxu0 0.0
    %657 = vmatprep.subr.mxu0 0.0
    %658 = vmatpush1.msra.mxu0 0.0
    %659 = vmatprep.subr.mxu0 0.0
    %660 = vmatpush1.msra.mxu0 0.0
    %661 = vmatprep.subr.mxu0 0.0
    %662 = vmatpush1.msra.mxu0 0.0
    %663 = vmatprep.subr.mxu0 0.0
    %664 = vmatpush1.msra.mxu0 0.0
    %665 = vmatprep.subr.mxu0 0.0
    %666 = vmatpush1.msra.mxu0 0.0
    %667 = vmatprep.subr.mxu0 0.0
    %668 = vmatpush1.msra.mxu0 0.0
    %669 = vmatprep.subr.mxu0 0.0
    %670 = vmatpush1.msra.mxu0 0.0
    %671 = vmatprep.subr.mxu0 0.0
    %672 = vmatpush1.msra.mxu0 %v75
    %673 = vmatprep.subr.mxu0 0.0
    %674 = vmatpush1.msra.mxu0 %v74
    %675 = vmatprep.subr.mxu0 0.0
    %676 = vmatpush1.msra.mxu0 %v73
    %677 = vmatprep.subr.mxu0 0.0
    %678 = vmatpush1.msra.mxu0 %v72
    %679 = vmatprep.subr.mxu0 0.0
    %680 = vmatpush1.msra.mxu0 %v71
    %681 = vmatprep.subr.mxu0 0.0
    %682 = vmatpush1.msra.mxu0 %v70
    %683 = vmatprep.subr.mxu0 0.0
    %684 = vmatpush1.msra.mxu0 %v69
    %685 = vmatprep.subr.mxu0 0.0
    %686 = vmatpush1.msra.mxu0 %v68
    %687 = vmatprep.subr.mxu0 0.0
    %688 = vmatpush2.msra.mxu0 0.0
    %689 = vmatprep.subr.mxu0 0.0
    %690 = vmatpush2.msra.mxu0 0.0
    %691 = vmatprep.subr.mxu0 0.0
    %692 = vmatpush2.msra.mxu0 0.0
    %693 = vmatprep.subr.mxu0 0.0
    %694 = vmatpush2.msra.mxu0 0.0
    %695 = vmatprep.subr.mxu0 0.0
    %696 = vmatpush2.msra.mxu0 0.0
    %697 = vmatprep.subr.mxu0 0.0
    %698 = vmatpush2.msra.mxu0 0.0
    %699 = vmatprep.subr.mxu0 0.0
    %700 = vmatpush2.msra.mxu0 0.0
    %701 = vmatprep.subr.mxu0 0.0
    %702 = vmatpush2.msra.mxu0 0.0
    %703 = vmatprep.subr.mxu0 0.0
    %704 = vmatpush2.msra.mxu0 0.0
    %705 = vmatprep.subr.mxu0 0.0
    %706 = vmatpush2.msra.mxu0 0.0
    %707 = vmatprep.subr.mxu0 0.0
    %708 = vmatpush2.msra.mxu0 0.0
    %709 = vmatprep.subr.mxu0 0.0
    %710 = vmatpush2.msra.mxu0 0.0
    %711 = vmatprep.subr.mxu0 0.0
    %712 = vmatpush2.msra.mxu0 0.0
    %713 = vmatprep.subr.mxu0 0.0
    %714 = vmatpush2.msra.mxu0 0.0
    %715 = vmatprep.subr.mxu0 0.0
    %716 = vmatpush2.msra.mxu0 0.0
    %717 = vmatprep.subr.mxu0 0.0
    %718 = vmatpush2.msra.mxu0 0.0
    %719 = vmatprep.mubr.f32.mxu0 0.0
    %720 = vmatmul.mubr.f32.gmra.mxu0 %v653
    %v721 = vpop.f32.mrf.mxu0
    %v722 = vadd.f32 0.0, %v721
    %v723 = vpop.f32.mrf.mxu0
    %724 = vdwg.mxu0
    %v725 = vmul.f32 %v722, 0.001953125
    %v726 = vmul.f32 %v651, %v651
    %v727 = vsub.f32 %v725, %v726
    %v728 = vadd.f32 %v727, 1e-05
    %v729 = vrsqrt.pop %v728
    %v730 = vmul.f32 %v546, %v729
    %v731 = vmul.f32 %v651, %v730
    %v732 = vsub.f32 %v547, %v731
    %vm733 = vcmask 31744
    %v735 = vsel %vm733, %v730, 0
    %v738 = vsel %vm733, %v68, 0
    %v741 = vsel %vm733, %v69, 0
    %v744 = vsel %vm733, %v70, 0
    %v747 = vsel %vm733, %v71, 0
    %v750 = vsel %vm733, %v72, 0
    %v753 = vsel %vm733, %v73, 0
    %v756 = vsel %vm733, %v74, 0
    %v759 = vsel %vm733, %v75, 0
    %761 = vmatprep.subr.mxu0 0.0
    %762 = vmatpush1.xpose.msra.mxu0 0.0
    %763 = vmatprep.subr.mxu0 0.0
    %764 = vmatpush1.xpose.msra.mxu0 0.0
    %765 = vmatprep.subr.mxu0 0.0
    %766 = vmatpush1.xpose.msra.mxu0 0.0
    %767 = vmatprep.subr.mxu0 0.0
    %768 = vmatpush1.xpose.msra.mxu0 0.0
    %769 = vmatprep.subr.mxu0 0.0
    %770 = vmatpush1.xpose.msra.mxu0 0.0
    %771 = vmatprep.subr.mxu0 0.0
    %772 = vmatpush1.xpose.msra.mxu0 0.0
    %773 = vmatprep.subr.mxu0 0.0
    %774 = vmatpush1.xpose.msra.mxu0 0.0
    %775 = vmatprep.subr.mxu0 0.0
    %776 = vmatpush1.xpose.msra.mxu0 0.0
    %777 = vmatprep.subr.mxu0 0.0
    %778 = vmatpush1.xpose.msra.mxu0 %v759
    %779 = vmatprep.subr.mxu0 0.0
    %780 = vmatpush1.xpose.msra.mxu0 %v756
    %781 = vmatprep.subr.mxu0 0.0
    %782 = vmatpush1.xpose.msra.mxu0 %v753
    %783 = vmatprep.subr.mxu0 0.0
    %784 = vmatpush1.xpose.msra.mxu0 %v750
    %785 = vmatprep.subr.mxu0 0.0
    %786 = vmatpush1.xpose.msra.mxu0 %v747
    %787 = vmatprep.subr.mxu0 0.0
    %788 = vmatpush1.xpose.msra.mxu0 %v744
    %789 = vmatprep.subr.mxu0 0.0
    %790 = vmatpush1.xpose.msra.mxu0 %v741
    %791 = vmatprep.subr.mxu0 0.0
    %792 = vmatpush1.xpose.msra.mxu0 %v738
    %793 = vmatprep.subr.mxu0 0.0
    %794 = vmatpush2.xpose.msra.mxu0 0.0
    %795 = vmatprep.subr.mxu0 0.0
    %796 = vmatpush2.xpose.msra.mxu0 0.0
    %797 = vmatprep.subr.mxu0 0.0
    %798 = vmatpush2.xpose.msra.mxu0 0.0
    %799 = vmatprep.subr.mxu0 0.0
    %800 = vmatpush2.xpose.msra.mxu0 0.0
    %801 = vmatprep.subr.mxu0 0.0
    %802 = vmatpush2.xpose.msra.mxu0 0.0
    %803 = vmatprep.subr.mxu0 0.0
    %804 = vmatpush2.xpose.msra.mxu0 0.0
    %805 = vmatprep.subr.mxu0 0.0
    %806 = vmatpush2.xpose.msra.mxu0 0.0
    %807 = vmatprep.subr.mxu0 0.0
    %808 = vmatpush2.xpose.msra.mxu0 0.0
    %809 = vmatprep.subr.mxu0 0.0
    %810 = vmatpush2.xpose.msra.mxu0 0.0
    %811 = vmatprep.subr.mxu0 0.0
    %812 = vmatpush2.xpose.msra.mxu0 0.0
    %813 = vmatprep.subr.mxu0 0.0
    %814 = vmatpush2.xpose.msra.mxu0 0.0
    %815 = vmatprep.subr.mxu0 0.0
    %816 = vmatpush2.xpose.msra.mxu0 0.0
    %817 = vmatprep.subr.mxu0 0.0
    %818 = vmatpush2.xpose.msra.mxu0 0.0
    %819 = vmatprep.subr.mxu0 0.0
    %820 = vmatpush2.xpose.msra.mxu0 0.0
    %821 = vmatprep.subr.mxu0 0.0
    %822 = vmatpush2.xpose.msra.mxu0 0.0
    %823 = vmatprep.subr.mxu0 0.0
    %824 = vmatpush2.xpose.msra.mxu0 0.0
    %825 = vmatprep.mubr.f32.mxu0 0.0
    %826 = vmatmul.mubr.f32.gmra.mxu0 %v735
    %v827 = vpop.f32.mrf.mxu0
    %v828 = vadd.f32 0.0, %v827
    %v829 = vpop.f32.mrf.mxu0
    %830 = vdwg.mxu0
    %v832 = vsel %vm733, %v732, 0
    %834 = vmatprep.subr.mxu0 0.0
    %835 = vmatpush1.xpose.msra.mxu0 0.0
    %836 = vmatprep.subr.mxu0 0.0
    %837 = vmatpush1.xpose.msra.mxu0 0.0
    %838 = vmatprep.subr.mxu0 0.0
    %839 = vmatpush1.xpose.msra.mxu0 0.0
    %840 = vmatprep.subr.mxu0 0.0
    %841 = vmatpush1.xpose.msra.mxu0 0.0
    %842 = vmatprep.subr.mxu0 0.0
    %843 = vmatpush1.xpose.msra.mxu0 0.0
    %844 = vmatprep.subr.mxu0 0.0
    %845 = vmatpush1.xpose.msra.mxu0 0.0
    %846 = vmatprep.subr.mxu0 0.0
    %847 = vmatpush1.xpose.msra.mxu0 0.0
    %848 = vmatprep.subr.mxu0 0.0
    %849 = vmatpush1.xpose.msra.mxu0 0.0
    %850 = vmatprep.subr.mxu0 0.0
    %851 = vmatpush1.xpose.msra.mxu0 %v759
    %852 = vmatprep.subr.mxu0 0.0
    %853 = vmatpush1.xpose.msra.mxu0 %v756
    %854 = vmatprep.subr.mxu0 0.0
    %855 = vmatpush1.xpose.msra.mxu0 %v753
    %856 = vmatprep.subr.mxu0 0.0
    %857 = vmatpush1.xpose.msra.mxu0 %v750
    %858 = vmatprep.subr.mxu0 0.0
    %859 = vmatpush1.xpose.msra.mxu0 %v747
    %860 = vmatprep.subr.mxu0 0.0
    %861 = vmatpush1.xpose.msra.mxu0 %v744
    %862 = vmatprep.subr.mxu0 0.0
    %863 = vmatpush1.xpose.msra.mxu0 %v741
    %864 = vmatprep.subr.mxu0 0.0
    %865 = vmatpush1.xpose.msra.mxu0 %v738
    %866 = vmatprep.subr.mxu0 0.0
    %867 = vmatpush2.xpose.msra.mxu0 0.0
    %868 = vmatprep.subr.mxu0 0.0
    %869 = vmatpush2.xpose.msra.mxu0 0.0
    %870 = vmatprep.subr.mxu0 0.0
    %871 = vmatpush2.xpose.msra.mxu0 0.0
    %872 = vmatprep.subr.mxu0 0.0
    %873 = vmatpush2.xpose.msra.mxu0 0.0
    %874 = vmatprep.subr.mxu0 0.0
    %875 = vmatpush2.xpose.msra.mxu0 0.0
    %876 = vmatprep.subr.mxu0 0.0
    %877 = vmatpush2.xpose.msra.mxu0 0.0
    %878 = vmatprep.subr.mxu0 0.0
    %879 = vmatpush2.xpose.msra.mxu0 0.0
    %880 = vmatprep.subr.mxu0 0.0
    %881 = vmatpush2.xpose.msra.mxu0 0.0
    %882 = vmatprep.subr.mxu0 0.0
    %883 = vmatpush2.xpose.msra.mxu0 0.0
    %884 = vmatprep.subr.mxu0 0.0
    %885 = vmatpush2.xpose.msra.mxu0 0.0
    %886 = vmatprep.subr.mxu0 0.0
    %887 = vmatpush2.xpose.msra.mxu0 0.0
    %888 = vmatprep.subr.mxu0 0.0
    %889 = vmatpush2.xpose.msra.mxu0 0.0
    %890 = vmatprep.subr.mxu0 0.0
    %891 = vmatpush2.xpose.msra.mxu0 0.0
    %892 = vmatprep.subr.mxu0 0.0
    %893 = vmatpush2.xpose.msra.mxu0 0.0
    %894 = vmatprep.subr.mxu0 0.0
    %895 = vmatpush2.xpose.msra.mxu0 0.0
    %896 = vmatprep.subr.mxu0 0.0
    %897 = vmatpush2.xpose.msra.mxu0 0.0
    %898 = vmatprep.mubr.f32.mxu0 0.0
    %899 = vmatmul.mubr.f32.gmra.mxu0 %v832
    %v900 = vpop.f32.mrf.mxu0
    %v901 = vadd.f32 0.0, %v900
    %v902 = vpop.f32.mrf.mxu0
    %903 = vdwg.mxu0
    %v904 = vlaneseq
    %v905 = vshrl.u32 %v904, 7
    %v906 = vsub.s32 0, %v905
    %v907 = vrot.slane %v828, %v906
    %v908 = vmul.f32 %v542, %v907
    %v909 = vmul.f32 %v543, %v907
    %v910 = vmul.f32 %v544, %v907
    %v911 = vmul.f32 %v545, %v907
    %v912 = vlaneseq
    %v913 = vshrl.u32 %v912, 7
    %v914 = vsub.s32 0, %v913
    %v915 = vrot.slane %v901, %v914
    %v916 = vadd.f32 %v908, %v915
    %v917 = vadd.f32 %v909, %v915
    %v918 = vadd.f32 %v910, %v915
    %v919 = vadd.f32 %v911, %v915
    %v920 = vmax.f32 %v916, 0.0
    %v921 = vmax.f32 %v917, 0.0
    %v922 = vmax.f32 %v918, 0.0
    %v923 = vmax.f32 %v919, 0.0
    %v924 = vld [vmem:[%s6] sm:$0x1]
    %s925 = scalar_lea.vmem [#allocation5], 64
    %v926 = vld [vmem:[%s925] sm:$0xff]
    %v927 = vld [vmem:[%s925 + $0x8] sm:$0xff]
    %v928 = vld [vmem:[%s925 + $0x10] sm:$0xff]
    %v929 = vld [vmem:[%s925 + $0x18] sm:$0xff]
    %v930 = vld [vmem:[%s925 + $0x20] sm:$0xff]
    %v931 = vld [vmem:[%s925 + $0x28] sm:$0xff]
    %v932 = vld [vmem:[%s925 + $0x30] sm:$0xff]
    %v933 = vld [vmem:[%s925 + $0x38] sm:$0xff]
    %v935 = vlaneseq
    %v936 = vshrl.u32 %v935, 7
    %v937 = vsub.s32 0, %v936
    %v938 = vrot.slane %v924, %v937
    %v941 = vsel %vm145, %v920, 0
    %v944 = vsel %vm145, %v921, 0
    %v947 = vsel %vm145, %v922, 0
    %v950 = vsel %vm145, %v923, 0
    %952 = vmatprep.subr.mxu0 0.0
    %953 = vmatpush1.msra.mxu0 0.0
    %954 = vmatprep.subr.mxu0 0.0
    %955 = vmatpush1.msra.mxu0 0.0
    %956 = vmatprep.subr.mxu0 0.0
    %957 = vmatpush1.msra.mxu0 0.0
    %958 = vmatprep.subr.mxu0 0.0
    %959 = vmatpush1.msra.mxu0 0.0
    %960 = vmatprep.subr.mxu0 0.0
    %961 = vmatpush1.msra.mxu0 0.0
    %962 = vmatprep.subr.mxu0 0.0
    %963 = vmatpush1.msra.mxu0 0.0
    %964 = vmatprep.subr.mxu0 0.0
    %965 = vmatpush1.msra.mxu0 0.0
    %966 = vmatprep.subr.mxu0 0.0
    %967 = vmatpush1.msra.mxu0 0.0
    %968 = vmatprep.subr.mxu0 0.0
    %969 = vmatpush1.msra.mxu0 %v933
    %970 = vmatprep.subr.mxu0 0.0
    %971 = vmatpush1.msra.mxu0 %v932
    %972 = vmatprep.subr.mxu0 0.0
    %973 = vmatpush1.msra.mxu0 %v931
    %974 = vmatprep.subr.mxu0 0.0
    %975 = vmatpush1.msra.mxu0 %v930
    %976 = vmatprep.subr.mxu0 0.0
    %977 = vmatpush1.msra.mxu0 %v929
    %978 = vmatprep.subr.mxu0 0.0
    %979 = vmatpush1.msra.mxu0 %v928
    %980 = vmatprep.subr.mxu0 0.0
    %981 = vmatpush1.msra.mxu0 %v927
    %982 = vmatprep.subr.mxu0 0.0
    %983 = vmatpush1.msra.mxu0 %v926
    %984 = vmatprep.subr.mxu0 0.0
    %985 = vmatpush2.msra.mxu0 0.0
    %986 = vmatprep.subr.mxu0 0.0
    %987 = vmatpush2.msra.mxu0 0.0
    %988 = vmatprep.subr.mxu0 0.0
    %989 = vmatpush2.msra.mxu0 0.0
    %990 = vmatprep.subr.mxu0 0.0
    %991 = vmatpush2.msra.mxu0 0.0
    %992 = vmatprep.subr.mxu0 0.0
    %993 = vmatpush2.msra.mxu0 0.0
    %994 = vmatprep.subr.mxu0 0.0
    %995 = vmatpush2.msra.mxu0 0.0
    %996 = vmatprep.subr.mxu0 0.0
    %997 = vmatpush2.msra.mxu0 0.0
    %998 = vmatprep.subr.mxu0 0.0
    %999 = vmatpush2.msra.mxu0 0.0
    %1000 = vmatprep.subr.mxu0 0.0
    %1001 = vmatpush2.msra.mxu0 0.0
    %1002 = vmatprep.subr.mxu0 0.0
    %1003 = vmatpush2.msra.mxu0 0.0
    %1004 = vmatprep.subr.mxu0 0.0
    %1005 = vmatpush2.msra.mxu0 0.0
    %1006 = vmatprep.subr.mxu0 0.0
    %1007 = vmatpush2.msra.mxu0 0.0
    %1008 = vmatprep.subr.mxu0 0.0
    %1009 = vmatpush2.msra.mxu0 0.0
    %1010 = vmatprep.subr.mxu0 0.0
    %1011 = vmatpush2.msra.mxu0 0.0
    %1012 = vmatprep.subr.mxu0 0.0
    %1013 = vmatpush2.msra.mxu0 0.0
    %1014 = vmatprep.subr.mxu0 0.0
    %1015 = vmatpush2.msra.mxu0 0.0
    %1016 = vmatprep.mubr.f32.mxu0 0.0
    %1017 = vmatmul.mubr.f32.gmra.mxu0 %v941
    %v1018 = vpop.f32.mrf.mxu0
    %v1019 = vadd.f32 %v938, %v1018
    %v1020 = vpop.f32.mrf.mxu0
    %1021 = vmatprep.mubr.f32.mxu0 0.0
    %1022 = vmatmul.mubr.f32.gmra.mxu0 %v944
    %v1023 = vpop.f32.mrf.mxu0
    %v1024 = vadd.f32 %v938, %v1023
    %v1025 = vpop.f32.mrf.mxu0
    %1026 = vmatprep.mubr.f32.mxu0 0.0
    %1027 = vmatmul.mubr.f32.gmra.mxu0 %v947
    %v1028 = vpop.f32.mrf.mxu0
    %v1029 = vadd.f32 %v938, %v1028
    %v1030 = vpop.f32.mrf.mxu0
    %1031 = vmatprep.mubr.f32.mxu0 0.0
    %1032 = vmatmul.mubr.f32.gmra.mxu0 %v950
    %v1033 = vpop.f32.mrf.mxu0
    %v1034 = vadd.f32 %v938, %v1033
    %v1035 = vpop.f32.mrf.mxu0
    %1036 = vdwg.mxu0
    %v1037 = vrot.slane %v923, 7
    %v1039 = vrot.slane %v920, 7
    %v1040 = vrot.slane %v921, 7
    %v1041 = vsel %vm245, %v1039, %v1040
    %v1042 = vrot.slane %v922, 7
    %v1043 = vsel %vm245, %v1040, %v1042
    %v1044 = vsel %vm245, %v1042, %v1037
    %v1049 = vsel %vm245, %v1037, %v1039
    %v1050 = vsel %vm277, %v1049, 0.0
    %v1051 = vsel %vm278, %v1041, 0.0
    %v1052 = vsel %vm279, %v1043, 0.0
    %v1053 = vsel %vm280, %v1044, 0.0
    %v1054 = vld [vmem:[#allocation5] sm:$0xff]
    %v1055 = vld [vmem:[#allocation5 + $0x8] sm:$0xff]
    %v1056 = vld [vmem:[#allocation5 + $0x10] sm:$0xff]
    %v1057 = vld [vmem:[#allocation5 + $0x18] sm:$0xff]
    %v1058 = vld [vmem:[#allocation5 + $0x20] sm:$0xff]
    %v1059 = vld [vmem:[#allocation5 + $0x28] sm:$0xff]
    %v1060 = vld [vmem:[#allocation5 + $0x30] sm:$0xff]
    %v1061 = vld [vmem:[#allocation5 + $0x38] sm:$0xff]
    %v1063 = vsel %vm145, %v1050, 0
    %v1066 = vsel %vm145, %v1051, 0
    %v1069 = vsel %vm145, %v1052, 0
    %v1072 = vsel %vm145, %v1053, 0
    %1074 = vmatprep.subr.mxu0 0.0
    %1075 = vmatpush1.msra.mxu0 0.0
    %1076 = vmatprep.subr.mxu0 0.0
    %1077 = vmatpush1.msra.mxu0 0.0
    %1078 = vmatprep.subr.mxu0 0.0
    %1079 = vmatpush1.msra.mxu0 0.0
    %1080 = vmatprep.subr.mxu0 0.0
    %1081 = vmatpush1.msra.mxu0 0.0
    %1082 = vmatprep.subr.mxu0 0.0
    %1083 = vmatpush1.msra.mxu0 0.0
    %1084 = vmatprep.subr.mxu0 0.0
    %1085 = vmatpush1.msra.mxu0 0.0
    %1086 = vmatprep.subr.mxu0 0.0
    %1087 = vmatpush1.msra.mxu0 0.0
    %1088 = vmatprep.subr.mxu0 0.0
    %1089 = vmatpush1.msra.mxu0 0.0
    %1090 = vmatprep.subr.mxu0 0.0
    %1091 = vmatpush1.msra.mxu0 %v1061
    %1092 = vmatprep.subr.mxu0 0.0
    %1093 = vmatpush1.msra.mxu0 %v1060
    %1094 = vmatprep.subr.mxu0 0.0
    %1095 = vmatpush1.msra.mxu0 %v1059
    %1096 = vmatprep.subr.mxu0 0.0
    %1097 = vmatpush1.msra.mxu0 %v1058
    %1098 = vmatprep.subr.mxu0 0.0
    %1099 = vmatpush1.msra.mxu0 %v1057
    %1100 = vmatprep.subr.mxu0 0.0
    %1101 = vmatpush1.msra.mxu0 %v1056
    %1102 = vmatprep.subr.mxu0 0.0
    %1103 = vmatpush1.msra.mxu0 %v1055
    %1104 = vmatprep.subr.mxu0 0.0
    %1105 = vmatpush1.msra.mxu0 %v1054
    %1106 = vmatprep.subr.mxu0 0.0
    %1107 = vmatpush2.msra.mxu0 0.0
    %1108 = vmatprep.subr.mxu0 0.0
    %1109 = vmatpush2.msra.mxu0 0.0
    %1110 = vmatprep.subr.mxu0 0.0
    %1111 = vmatpush2.msra.mxu0 0.0
    %1112 = vmatprep.subr.mxu0 0.0
    %1113 = vmatpush2.msra.mxu0 0.0
    %1114 = vmatprep.subr.mxu0 0.0
    %1115 = vmatpush2.msra.mxu0 0.0
    %1116 = vmatprep.subr.mxu0 0.0
    %1117 = vmatpush2.msra.mxu0 0.0
    %1118 = vmatprep.subr.mxu0 0.0
    %1119 = vmatpush2.msra.mxu0 0.0
    %1120 = vmatprep.subr.mxu0 0.0
    %1121 = vmatpush2.msra.mxu0 0.0
    %1122 = vmatprep.subr.mxu0 0.0
    %1123 = vmatpush2.msra.mxu0 0.0
    %1124 = vmatprep.subr.mxu0 0.0
    %1125 = vmatpush2.msra.mxu0 0.0
    %1126 = vmatprep.subr.mxu0 0.0
    %1127 = vmatpush2.msra.mxu0 0.0
    %1128 = vmatprep.subr.mxu0 0.0
    %1129 = vmatpush2.msra.mxu0 0.0
    %1130 = vmatprep.subr.mxu0 0.0
    %1131 = vmatpush2.msra.mxu0 0.0
    %1132 = vmatprep.subr.mxu0 0.0
    %1133 = vmatpush2.msra.mxu0 0.0
    %1134 = vmatprep.subr.mxu0 0.0
    %1135 = vmatpush2.msra.mxu0 0.0
    %1136 = vmatprep.subr.mxu0 0.0
    %1137 = vmatpush2.msra.mxu0 0.0
    %1138 = vmatprep.mubr.f32.mxu0 0.0
    %1139 = vmatmul.mubr.f32.gmra.mxu0 %v1063
    %v1140 = vpop.f32.mrf.mxu0
    %v1141 = vadd.f32 0.0, %v1140
    %v1142 = vpop.f32.mrf.mxu0
    %1143 = vmatprep.mubr.f32.mxu0 0.0
    %1144 = vmatmul.mubr.f32.gmra.mxu0 %v1066
    %v1145 = vpop.f32.mrf.mxu0
    %v1146 = vadd.f32 0.0, %v1145
    %v1147 = vpop.f32.mrf.mxu0
    %1148 = vmatprep.mubr.f32.mxu0 0.0
    %1149 = vmatmul.mubr.f32.gmra.mxu0 %v1069
    %v1150 = vpop.f32.mrf.mxu0
    %v1151 = vadd.f32 0.0, %v1150
    %v1152 = vpop.f32.mrf.mxu0
    %1153 = vmatprep.mubr.f32.mxu0 0.0
    %1154 = vmatmul.mubr.f32.gmra.mxu0 %v1072
    %v1155 = vpop.f32.mrf.mxu0
    %v1156 = vadd.f32 0.0, %v1155
    %v1157 = vpop.f32.mrf.mxu0
    %1158 = vdwg.mxu0
    %v1159 = vadd.f32 %v1019, %v1141
    %v1160 = vadd.f32 %v1024, %v1146
    %v1161 = vadd.f32 %v1029, %v1151
    %v1162 = vadd.f32 %v1034, %v1156
    %v1163 = vrot.slane %v920, 1
    %v1164 = vrot.slane %v921, 1
    %v1165 = vsel %vm394, %v1163, %v1164
    %v1166 = vrot.slane %v922, 1
    %v1167 = vsel %vm394, %v1164, %v1166
    %v1168 = vrot.slane %v923, 1
    %v1169 = vsel %vm394, %v1166, %v1168
    %v1175 = vsel %vm394, %v1168, %v1163
    %v1176 = vsel %vm428, %v1165, 0.0
    %v1177 = vsel %vm429, %v1167, 0.0
    %v1178 = vsel %vm430, %v1169, 0.0
    %v1179 = vsel %vm431, %v1175, 0.0
    %s1180 = scalar_lea.vmem [#allocation5], 128
    %v1181 = vld [vmem:[%s1180] sm:$0xff]
    %v1182 = vld [vmem:[%s1180 + $0x8] sm:$0xff]
    %v1183 = vld [vmem:[%s1180 + $0x10] sm:$0xff]
    %v1184 = vld [vmem:[%s1180 + $0x18] sm:$0xff]
    %v1185 = vld [vmem:[%s1180 + $0x20] sm:$0xff]
    %v1186 = vld [vmem:[%s1180 + $0x28] sm:$0xff]
    %v1187 = vld [vmem:[%s1180 + $0x30] sm:$0xff]
    %v1188 = vld [vmem:[%s1180 + $0x38] sm:$0xff]
    %v1190 = vsel %vm145, %v1176, 0
    %v1193 = vsel %vm145, %v1177, 0
    %v1196 = vsel %vm145, %v1178, 0
    %v1199 = vsel %vm145, %v1179, 0
    %1201 = vmatprep.subr.mxu0 0.0
    %1202 = vmatpush1.msra.mxu0 0.0
    %1203 = vmatprep.subr.mxu0 0.0
    %1204 = vmatpush1.msra.mxu0 0.0
    %1205 = vmatprep.subr.mxu0 0.0
    %1206 = vmatpush1.msra.mxu0 0.0
    %1207 = vmatprep.subr.mxu0 0.0
    %1208 = vmatpush1.msra.mxu0 0.0
    %1209 = vmatprep.subr.mxu0 0.0
    %1210 = vmatpush1.msra.mxu0 0.0
    %1211 = vmatprep.subr.mxu0 0.0
    %1212 = vmatpush1.msra.mxu0 0.0
    %1213 = vmatprep.subr.mxu0 0.0
    %1214 = vmatpush1.msra.mxu0 0.0
    %1215 = vmatprep.subr.mxu0 0.0
    %1216 = vmatpush1.msra.mxu0 0.0
    %1217 = vmatprep.subr.mxu0 0.0
    %1218 = vmatpush1.msra.mxu0 %v1188
    %1219 = vmatprep.subr.mxu0 0.0
    %1220 = vmatpush1.msra.mxu0 %v1187
    %1221 = vmatprep.subr.mxu0 0.0
    %1222 = vmatpush1.msra.mxu0 %v1186
    %1223 = vmatprep.subr.mxu0 0.0
    %1224 = vmatpush1.msra.mxu0 %v1185
    %1225 = vmatprep.subr.mxu0 0.0
    %1226 = vmatpush1.msra.mxu0 %v1184
    %1227 = vmatprep.subr.mxu0 0.0
    %1228 = vmatpush1.msra.mxu0 %v1183
    %1229 = vmatprep.subr.mxu0 0.0
    %1230 = vmatpush1.msra.mxu0 %v1182
    %1231 = vmatprep.subr.mxu0 0.0
    %1232 = vmatpush1.msra.mxu0 %v1181
    %1233 = vmatprep.subr.mxu0 0.0
    %1234 = vmatpush2.msra.mxu0 0.0
    %1235 = vmatprep.subr.mxu0 0.0
    %1236 = vmatpush2.msra.mxu0 0.0
    %1237 = vmatprep.subr.mxu0 0.0
    %1238 = vmatpush2.msra.mxu0 0.0
    %1239 = vmatprep.subr.mxu0 0.0
    %1240 = vmatpush2.msra.mxu0 0.0
    %1241 = vmatprep.subr.mxu0 0.0
    %1242 = vmatpush2.msra.mxu0 0.0
    %1243 = vmatprep.subr.mxu0 0.0
    %1244 = vmatpush2.msra.mxu0 0.0
    %1245 = vmatprep.subr.mxu0 0.0
    %1246 = vmatpush2.msra.mxu0 0.0
    %1247 = vmatprep.subr.mxu0 0.0
    %1248 = vmatpush2.msra.mxu0 0.0
    %1249 = vmatprep.subr.mxu0 0.0
    %1250 = vmatpush2.msra.mxu0 0.0
    %1251 = vmatprep.subr.mxu0 0.0
    %1252 = vmatpush2.msra.mxu0 0.0
    %1253 = vmatprep.subr.mxu0 0.0
    %1254 = vmatpush2.msra.mxu0 0.0
    %1255 = vmatprep.subr.mxu0 0.0
    %1256 = vmatpush2.msra.mxu0 0.0
    %1257 = vmatprep.subr.mxu0 0.0
    %1258 = vmatpush2.msra.mxu0 0.0
    %1259 = vmatprep.subr.mxu0 0.0
    %1260 = vmatpush2.msra.mxu0 0.0
    %1261 = vmatprep.subr.mxu0 0.0
    %1262 = vmatpush2.msra.mxu0 0.0
    %1263 = vmatprep.subr.mxu0 0.0
    %1264 = vmatpush2.msra.mxu0 0.0
    %1265 = vmatprep.mubr.f32.mxu0 0.0
    %1266 = vmatmul.mubr.f32.gmra.mxu0 %v1190
    %v1267 = vpop.f32.mrf.mxu0
    %v1268 = vadd.f32 0.0, %v1267
    %v1269 = vpop.f32.mrf.mxu0
    %1270 = vmatprep.mubr.f32.mxu0 0.0
    %1271 = vmatmul.mubr.f32.gmra.mxu0 %v1193
    %v1272 = vpop.f32.mrf.mxu0
    %v1273 = vadd.f32 0.0, %v1272
    %v1274 = vpop.f32.mrf.mxu0
    %1275 = vmatprep.mubr.f32.mxu0 0.0
    %1276 = vmatmul.mubr.f32.gmra.mxu0 %v1196
    %v1277 = vpop.f32.mrf.mxu0
    %v1278 = vadd.f32 0.0, %v1277
    %v1279 = vpop.f32.mrf.mxu0
    %1280 = vmatprep.mubr.f32.mxu0 0.0
    %1281 = vmatmul.mubr.f32.gmra.mxu0 %v1199
    %v1282 = vpop.f32.mrf.mxu0
    %v1283 = vadd.f32 0.0, %v1282
    %v1284 = vpop.f32.mrf.mxu0
    %1285 = vdwg.mxu0
    %v1286 = vadd.f32 %v1159, %v1268
    %v1287 = vadd.f32 %v1160, %v1273
    %v1288 = vadd.f32 %v1161, %v1278
    %v1289 = vadd.f32 %v1162, %v1283
    %v1290 = vld [vmem:[%s7] sm:$0x1]
    %v1291 = vld [vmem:[%s8] sm:$0x1]
    %v1292 = vsel %vm145, %v1286, 0.0
    %v1293 = vsel %vm145, %v1287, 0.0
    %v1294 = vadd.f32 %v1292, %v1293
    %v1295 = vsel %vm145, %v1288, 0.0
    %v1296 = vadd.f32 %v1294, %v1295
    %v1297 = vsel %vm145, %v1289, 0.0
    %v1298 = vadd.f32 %v1296, %v1297
    %v1299 = vrot.slane %v1298, 4
    %v1300 = vadd.f32 %v1298, %v1299
    %v1301 = vrot.slane %v1300, 2
    %v1302 = vadd.f32 %v1300, %v1301
    %v1303 = vrot.slane %v1302, 1
    %v1304 = vadd.f32 %v1302, %v1303
    %v1305 = vmul.f32 %v1286, %v1286
    %v1306 = vmul.f32 %v1287, %v1287
    %v1307 = vmul.f32 %v1288, %v1288
    %v1308 = vmul.f32 %v1289, %v1289
    %v1309 = vsel %vm145, %v1305, 0.0
    %v1310 = vsel %vm145, %v1306, 0.0
    %v1311 = vadd.f32 %v1309, %v1310
    %v1312 = vsel %vm145, %v1307, 0.0
    %v1313 = vadd.f32 %v1311, %v1312
    %v1314 = vsel %vm145, %v1308, 0.0
    %v1315 = vadd.f32 %v1313, %v1314
    %v1316 = vrot.slane %v1315, 4
    %v1317 = vadd.f32 %v1315, %v1316
    %v1318 = vrot.slane %v1317, 2
    %v1319 = vadd.f32 %v1317, %v1318
    %v1320 = vrot.slane %v1319, 1
    %v1321 = vadd.f32 %v1319, %v1320
    %v1323 = vsel %vm145, %v1304, 0
    %1325 = vmatprep.subr.mxu0 0.0
    %1326 = vmatpush1.msra.mxu0 0.0
    %1327 = vmatprep.subr.mxu0 0.0
    %1328 = vmatpush1.msra.mxu0 0.0
    %1329 = vmatprep.subr.mxu0 0.0
    %1330 = vmatpush1.msra.mxu0 0.0
    %1331 = vmatprep.subr.mxu0 0.0
    %1332 = vmatpush1.msra.mxu0 0.0
    %1333 = vmatprep.subr.mxu0 0.0
    %1334 = vmatpush1.msra.mxu0 0.0
    %1335 = vmatprep.subr.mxu0 0.0
    %1336 = vmatpush1.msra.mxu0 0.0
    %1337 = vmatprep.subr.mxu0 0.0
    %1338 = vmatpush1.msra.mxu0 0.0
    %1339 = vmatprep.subr.mxu0 0.0
    %1340 = vmatpush1.msra.mxu0 0.0
    %1341 = vmatprep.subr.mxu0 0.0
    %1342 = vmatpush1.msra.mxu0 %v75
    %1343 = vmatprep.subr.mxu0 0.0
    %1344 = vmatpush1.msra.mxu0 %v74
    %1345 = vmatprep.subr.mxu0 0.0
    %1346 = vmatpush1.msra.mxu0 %v73
    %1347 = vmatprep.subr.mxu0 0.0
    %1348 = vmatpush1.msra.mxu0 %v72
    %1349 = vmatprep.subr.mxu0 0.0
    %1350 = vmatpush1.msra.mxu0 %v71
    %1351 = vmatprep.subr.mxu0 0.0
    %1352 = vmatpush1.msra.mxu0 %v70
    %1353 = vmatprep.subr.mxu0 0.0
    %1354 = vmatpush1.msra.mxu0 %v69
    %1355 = vmatprep.subr.mxu0 0.0
    %1356 = vmatpush1.msra.mxu0 %v68
    %1357 = vmatprep.subr.mxu0 0.0
    %1358 = vmatpush2.msra.mxu0 0.0
    %1359 = vmatprep.subr.mxu0 0.0
    %1360 = vmatpush2.msra.mxu0 0.0
    %1361 = vmatprep.subr.mxu0 0.0
    %1362 = vmatpush2.msra.mxu0 0.0
    %1363 = vmatprep.subr.mxu0 0.0
    %1364 = vmatpush2.msra.mxu0 0.0
    %1365 = vmatprep.subr.mxu0 0.0
    %1366 = vmatpush2.msra.mxu0 0.0
    %1367 = vmatprep.subr.mxu0 0.0
    %1368 = vmatpush2.msra.mxu0 0.0
    %1369 = vmatprep.subr.mxu0 0.0
    %1370 = vmatpush2.msra.mxu0 0.0
    %1371 = vmatprep.subr.mxu0 0.0
    %1372 = vmatpush2.msra.mxu0 0.0
    %1373 = vmatprep.subr.mxu0 0.0
    %1374 = vmatpush2.msra.mxu0 0.0
    %1375 = vmatprep.subr.mxu0 0.0
    %1376 = vmatpush2.msra.mxu0 0.0
    %1377 = vmatprep.subr.mxu0 0.0
    %1378 = vmatpush2.msra.mxu0 0.0
    %1379 = vmatprep.subr.mxu0 0.0
    %1380 = vmatpush2.msra.mxu0 0.0
    %1381 = vmatprep.subr.mxu0 0.0
    %1382 = vmatpush2.msra.mxu0 0.0
    %1383 = vmatprep.subr.mxu0 0.0
    %1384 = vmatpush2.msra.mxu0 0.0
    %1385 = vmatprep.subr.mxu0 0.0
    %1386 = vmatpush2.msra.mxu0 0.0
    %1387 = vmatprep.subr.mxu0 0.0
    %1388 = vmatpush2.msra.mxu0 0.0
    %1389 = vmatprep.mubr.f32.mxu0 0.0
    %1390 = vmatmul.mubr.f32.gmra.mxu0 %v1323
    %v1391 = vpop.f32.mrf.mxu0
    %v1392 = vadd.f32 0.0, %v1391
    %v1393 = vpop.f32.mrf.mxu0
    %1394 = vdwg.mxu0
    %v1395 = vmul.f32 %v1392, 0.001953125
    %v1397 = vsel %vm145, %v1321, 0
    %1399 = vmatprep.subr.mxu0 0.0
    %1400 = vmatpush1.msra.mxu0 0.0
    %1401 = vmatprep.subr.mxu0 0.0
    %1402 = vmatpush1.msra.mxu0 0.0
    %1403 = vmatprep.subr.mxu0 0.0
    %1404 = vmatpush1.msra.mxu0 0.0
    %1405 = vmatprep.subr.mxu0 0.0
    %1406 = vmatpush1.msra.mxu0 0.0
    %1407 = vmatprep.subr.mxu0 0.0
    %1408 = vmatpush1.msra.mxu0 0.0
    %1409 = vmatprep.subr.mxu0 0.0
    %1410 = vmatpush1.msra.mxu0 0.0
    %1411 = vmatprep.subr.mxu0 0.0
    %1412 = vmatpush1.msra.mxu0 0.0
    %1413 = vmatprep.subr.mxu0 0.0
    %1414 = vmatpush1.msra.mxu0 0.0
    %1415 = vmatprep.subr.mxu0 0.0
    %1416 = vmatpush1.msra.mxu0 %v75
    %1417 = vmatprep.subr.mxu0 0.0
    %1418 = vmatpush1.msra.mxu0 %v74
    %1419 = vmatprep.subr.mxu0 0.0
    %1420 = vmatpush1.msra.mxu0 %v73
    %1421 = vmatprep.subr.mxu0 0.0
    %1422 = vmatpush1.msra.mxu0 %v72
    %1423 = vmatprep.subr.mxu0 0.0
    %1424 = vmatpush1.msra.mxu0 %v71
    %1425 = vmatprep.subr.mxu0 0.0
    %1426 = vmatpush1.msra.mxu0 %v70
    %1427 = vmatprep.subr.mxu0 0.0
    %1428 = vmatpush1.msra.mxu0 %v69
    %1429 = vmatprep.subr.mxu0 0.0
    %1430 = vmatpush1.msra.mxu0 %v68
    %1431 = vmatprep.subr.mxu0 0.0
    %1432 = vmatpush2.msra.mxu0 0.0
    %1433 = vmatprep.subr.mxu0 0.0
    %1434 = vmatpush2.msra.mxu0 0.0
    %1435 = vmatprep.subr.mxu0 0.0
    %1436 = vmatpush2.msra.mxu0 0.0
    %1437 = vmatprep.subr.mxu0 0.0
    %1438 = vmatpush2.msra.mxu0 0.0
    %1439 = vmatprep.subr.mxu0 0.0
    %1440 = vmatpush2.msra.mxu0 0.0
    %1441 = vmatprep.subr.mxu0 0.0
    %1442 = vmatpush2.msra.mxu0 0.0
    %1443 = vmatprep.subr.mxu0 0.0
    %1444 = vmatpush2.msra.mxu0 0.0
    %1445 = vmatprep.subr.mxu0 0.0
    %1446 = vmatpush2.msra.mxu0 0.0
    %1447 = vmatprep.subr.mxu0 0.0
    %1448 = vmatpush2.msra.mxu0 0.0
    %1449 = vmatprep.subr.mxu0 0.0
    %1450 = vmatpush2.msra.mxu0 0.0
    %1451 = vmatprep.subr.mxu0 0.0
    %1452 = vmatpush2.msra.mxu0 0.0
    %1453 = vmatprep.subr.mxu0 0.0
    %1454 = vmatpush2.msra.mxu0 0.0
    %1455 = vmatprep.subr.mxu0 0.0
    %1456 = vmatpush2.msra.mxu0 0.0
    %1457 = vmatprep.subr.mxu0 0.0
    %1458 = vmatpush2.msra.mxu0 0.0
    %1459 = vmatprep.subr.mxu0 0.0
    %1460 = vmatpush2.msra.mxu0 0.0
    %1461 = vmatprep.subr.mxu0 0.0
    %1462 = vmatpush2.msra.mxu0 0.0
    %1463 = vmatprep.mubr.f32.mxu0 0.0
    %1464 = vmatmul.mubr.f32.gmra.mxu0 %v1397
    %v1465 = vpop.f32.mrf.mxu0
    %v1466 = vadd.f32 0.0, %v1465
    %v1467 = vpop.f32.mrf.mxu0
    %1468 = vdwg.mxu0
    %v1469 = vmul.f32 %v1466, 0.001953125
    %v1470 = vmul.f32 %v1395, %v1395
    %v1471 = vsub.f32 %v1469, %v1470
    %v1472 = vadd.f32 %v1471, 1e-05
    %v1473 = vrsqrt.pop %v1472
    %v1474 = vmul.f32 %v1290, %v1473
    %v1475 = vmul.f32 %v1395, %v1474
    %v1476 = vsub.f32 %v1291, %v1475
    %v1478 = vsel %vm733, %v1474, 0
    %1480 = vmatprep.subr.mxu0 0.0
    %1481 = vmatpush1.xpose.msra.mxu0 0.0
    %1482 = vmatprep.subr.mxu0 0.0
    %1483 = vmatpush1.xpose.msra.mxu0 0.0
    %1484 = vmatprep.subr.mxu0 0.0
    %1485 = vmatpush1.xpose.msra.mxu0 0.0
    %1486 = vmatprep.subr.mxu0 0.0
    %1487 = vmatpush1.xpose.msra.mxu0 0.0
    %1488 = vmatprep.subr.mxu0 0.0
    %1489 = vmatpush1.xpose.msra.mxu0 0.0
    %1490 = vmatprep.subr.mxu0 0.0
    %1491 = vmatpush1.xpose.msra.mxu0 0.0
    %1492 = vmatprep.subr.mxu0 0.0
    %1493 = vmatpush1.xpose.msra.mxu0 0.0
    %1494 = vmatprep.subr.mxu0 0.0
    %1495 = vmatpush1.xpose.msra.mxu0 0.0
    %1496 = vmatprep.subr.mxu0 0.0
    %1497 = vmatpush1.xpose.msra.mxu0 %v759
    %1498 = vmatprep.subr.mxu0 0.0
    %1499 = vmatpush1.xpose.msra.mxu0 %v756
    %1500 = vmatprep.subr.mxu0 0.0
    %1501 = vmatpush1.xpose.msra.mxu0 %v753
    %1502 = vmatprep.subr.mxu0 0.0
    %1503 = vmatpush1.xpose.msra.mxu0 %v750
    %1504 = vmatprep.subr.mxu0 0.0
    %1505 = vmatpush1.xpose.msra.mxu0 %v747
    %1506 = vmatprep.subr.mxu0 0.0
    %1507 = vmatpush1.xpose.msra.mxu0 %v744
    %1508 = vmatprep.subr.mxu0 0.0
    %1509 = vmatpush1.xpose.msra.mxu0 %v741
    %1510 = vmatprep.subr.mxu0 0.0
    %1511 = vmatpush1.xpose.msra.mxu0 %v738
    %1512 = vmatprep.subr.mxu0 0.0
    %1513 = vmatpush2.xpose.msra.mxu0 0.0
    %1514 = vmatprep.subr.mxu0 0.0
    %1515 = vmatpush2.xpose.msra.mxu0 0.0
    %1516 = vmatprep.subr.mxu0 0.0
    %1517 = vmatpush2.xpose.msra.mxu0 0.0
    %1518 = vmatprep.subr.mxu0 0.0
    %1519 = vmatpush2.xpose.msra.mxu0 0.0
    %1520 = vmatprep.subr.mxu0 0.0
    %1521 = vmatpush2.xpose.msra.mxu0 0.0
    %1522 = vmatprep.subr.mxu0 0.0
    %1523 = vmatpush2.xpose.msra.mxu0 0.0
    %1524 = vmatprep.subr.mxu0 0.0
    %1525 = vmatpush2.xpose.msra.mxu0 0.0
    %1526 = vmatprep.subr.mxu0 0.0
    %1527 = vmatpush2.xpose.msra.mxu0 0.0
    %1528 = vmatprep.subr.mxu0 0.0
    %1529 = vmatpush2.xpose.msra.mxu0 0.0
    %1530 = vmatprep.subr.mxu0 0.0
    %1531 = vmatpush2.xpose.msra.mxu0 0.0
    %1532 = vmatprep.subr.mxu0 0.0
    %1533 = vmatpush2.xpose.msra.mxu0 0.0
    %1534 = vmatprep.subr.mxu0 0.0
    %1535 = vmatpush2.xpose.msra.mxu0 0.0
    %1536 = vmatprep.subr.mxu0 0.0
    %1537 = vmatpush2.xpose.msra.mxu0 0.0
    %1538 = vmatprep.subr.mxu0 0.0
    %1539 = vmatpush2.xpose.msra.mxu0 0.0
    %1540 = vmatprep.subr.mxu0 0.0
    %1541 = vmatpush2.xpose.msra.mxu0 0.0
    %1542 = vmatprep.subr.mxu0 0.0
    %1543 = vmatpush2.xpose.msra.mxu0 0.0
    %1544 = vmatprep.mubr.f32.mxu0 0.0
    %1545 = vmatmul.mubr.f32.gmra.mxu0 %v1478
    %v1546 = vpop.f32.mrf.mxu0
    %v1547 = vadd.f32 0.0, %v1546
    %v1548 = vpop.f32.mrf.mxu0
    %1549 = vdwg.mxu0
    %v1551 = vsel %vm733, %v1476, 0
    %1553 = vmatprep.subr.mxu0 0.0
    %1554 = vmatpush1.xpose.msra.mxu0 0.0
    %1555 = vmatprep.subr.mxu0 0.0
    %1556 = vmatpush1.xpose.msra.mxu0 0.0
    %1557 = vmatprep.subr.mxu0 0.0
    %1558 = vmatpush1.xpose.msra.mxu0 0.0
    %1559 = vmatprep.subr.mxu0 0.0
    %1560 = vmatpush1.xpose.msra.mxu0 0.0
    %1561 = vmatprep.subr.mxu0 0.0
    %1562 = vmatpush1.xpose.msra.mxu0 0.0
    %1563 = vmatprep.subr.mxu0 0.0
    %1564 = vmatpush1.xpose.msra.mxu0 0.0
    %1565 = vmatprep.subr.mxu0 0.0
    %1566 = vmatpush1.xpose.msra.mxu0 0.0
    %1567 = vmatprep.subr.mxu0 0.0
    %1568 = vmatpush1.xpose.msra.mxu0 0.0
    %1569 = vmatprep.subr.mxu0 0.0
    %1570 = vmatpush1.xpose.msra.mxu0 %v759
    %1571 = vmatprep.subr.mxu0 0.0
    %1572 = vmatpush1.xpose.msra.mxu0 %v756
    %1573 = vmatprep.subr.mxu0 0.0
    %1574 = vmatpush1.xpose.msra.mxu0 %v753
    %1575 = vmatprep.subr.mxu0 0.0
    %1576 = vmatpush1.xpose.msra.mxu0 %v750
    %1577 = vmatprep.subr.mxu0 0.0
    %1578 = vmatpush1.xpose.msra.mxu0 %v747
    %1579 = vmatprep.subr.mxu0 0.0
    %1580 = vmatpush1.xpose.msra.mxu0 %v744
    %1581 = vmatprep.subr.mxu0 0.0
    %1582 = vmatpush1.xpose.msra.mxu0 %v741
    %1583 = vmatprep.subr.mxu0 0.0
    %1584 = vmatpush1.xpose.msra.mxu0 %v738
    %1585 = vmatprep.subr.mxu0 0.0
    %1586 = vmatpush2.xpose.msra.mxu0 0.0
    %1587 = vmatprep.subr.mxu0 0.0
    %1588 = vmatpush2.xpose.msra.mxu0 0.0
    %1589 = vmatprep.subr.mxu0 0.0
    %1590 = vmatpush2.xpose.msra.mxu0 0.0
    %1591 = vmatprep.subr.mxu0 0.0
    %1592 = vmatpush2.xpose.msra.mxu0 0.0
    %1593 = vmatprep.subr.mxu0 0.0
    %1594 = vmatpush2.xpose.msra.mxu0 0.0
    %1595 = vmatprep.subr.mxu0 0.0
    %1596 = vmatpush2.xpose.msra.mxu0 0.0
    %1597 = vmatprep.subr.mxu0 0.0
    %1598 = vmatpush2.xpose.msra.mxu0 0.0
    %1599 = vmatprep.subr.mxu0 0.0
    %1600 = vmatpush2.xpose.msra.mxu0 0.0
    %1601 = vmatprep.subr.mxu0 0.0
    %1602 = vmatpush2.xpose.msra.mxu0 0.0
    %1603 = vmatprep.subr.mxu0 0.0
    %1604 = vmatpush2.xpose.msra.mxu0 0.0
    %1605 = vmatprep.subr.mxu0 0.0
    %1606 = vmatpush2.xpose.msra.mxu0 0.0
    %1607 = vmatprep.subr.mxu0 0.0
    %1608 = vmatpush2.xpose.msra.mxu0 0.0
    %1609 = vmatprep.subr.mxu0 0.0
    %1610 = vmatpush2.xpose.msra.mxu0 0.0
    %1611 = vmatprep.subr.mxu0 0.0
    %1612 = vmatpush2.xpose.msra.mxu0 0.0
    %1613 = vmatprep.subr.mxu0 0.0
    %1614 = vmatpush2.xpose.msra.mxu0 0.0
    %1615 = vmatprep.subr.mxu0 0.0
    %1616 = vmatpush2.xpose.msra.mxu0 0.0
    %1617 = vmatprep.mubr.f32.mxu0 0.0
    %1618 = vmatmul.mubr.f32.gmra.mxu0 %v1551
    %v1619 = vpop.f32.mrf.mxu0
    %v1620 = vadd.f32 0.0, %v1619
    %v1621 = vpop.f32.mrf.mxu0
    %1622 = vdwg.mxu0
    %v1623 = vlaneseq
    %v1624 = vshrl.u32 %v1623, 7
    %v1625 = vsub.s32 0, %v1624
    %v1626 = vrot.slane %v1547, %v1625
    %v1627 = vmul.f32 %v1286, %v1626
    %v1628 = vmul.f32 %v1287, %v1626
    %v1629 = vmul.f32 %v1288, %v1626
    %v1630 = vmul.f32 %v1289, %v1626
    %v1631 = vlaneseq
    %v1632 = vshrl.u32 %v1631, 7
    %v1633 = vsub.s32 0, %v1632
    %v1634 = vrot.slane %v1620, %v1633
    %v1635 = vadd.f32 %v1627, %v1634
    %v1636 = vadd.f32 %v1628, %v1634
    %v1637 = vadd.f32 %v1629, %v1634
    %v1638 = vadd.f32 %v1630, %v1634
    %v1639 = vadd.f32 %v1635, %v64
    %v1640 = vadd.f32 %v1636, %v65
    %v1641 = vadd.f32 %v1637, %v66
    %v1642 = vadd.f32 %v1638, %v67
    %v1643 = vmax.f32 %v1639, 0.0
    %v1644 = vmax.f32 %v1640, 0.0
    %v1645 = vmax.f32 %v1641, 0.0
    %v1646 = vmax.f32 %v1642, 0.0
    %1647 = vst.msk [vmem:[#allocation7] sm:$0xff] %vm145, %v1643
    %1648 = vst.msk [vmem:[#allocation7 + $0x8] sm:$0xff] %vm145, %v1644
    %1649 = vst.msk [vmem:[#allocation7 + $0x10] sm:$0xff] %vm145, %v1645
    %1650 = vst.msk [vmem:[#allocation7 + $0x18] sm:$0xff] %vm145, %v1646
    // Predicated region
    $region50: #{tpu_custom_call.1} parent=1 // pred_check
      _
    $region51: #{tpu_custom_call.1} parent=1 // pred_check_branch
      %1652 = sbr.rel (0) target = $region53
    $region52: #{tpu_custom_call.1} parent=1 // pred_region
      %s1654 = ssub.s32 512, 512
      %1655 = vsyncadd [#allocation4], %s1654
      %s1656 = sshll.u32 [#allocation7], 4
      %s1657 = int_to_ptr.vmem [resolvable:$true] %s1656
      %1662 = dma.vmem_to_hbm [thread:$0]  %s1657, 512, %s10, [#allocation4], 128, 128, 8
    $region53: #{tpu_custom_call.1} parent=1 // pred_fallthru
      _
    // Predicated region
    $region54: #{tpu_custom_call.1} parent=1 // pred_check
      _
    $region55: #{tpu_custom_call.1} parent=1 // pred_check_branch
      %1664 = sbr.rel (0) target = $region57
    $region56: #{tpu_custom_call.1} parent=1 // pred_region
      %1665 = dma.done [#allocation4], 512
    $region57: #{tpu_custom_call.1} parent=1 // pred_fallthru
      _
    %1666 = vsyncpa [#allocation3], 1
    %1667 = vsyncpa [#allocation6], 1
    %1668 = vsyncpa [#allocation4], 1

</llo_original>
